<compile_context>
chip_gen: v7x
topology: tpu7x:2x2x1
jax: 0.10.0
libtpu: 0.0.40
codegen_flags: <defaults>
</compile_context>

<pallas_src>
import jax
import jax.numpy as jnp
from jax.experimental import pallas as pl
from jax.experimental.pallas import tpu as pltpu

HOPS = (1, 2, 3)               # must be (1, 2, ..., K) for the packed layout
K = len(HOPS)
EPS = 0.0                      # GINConv default eps
MM_DTYPE = jnp.bfloat16        # MXU operand dtype (accumulation stays f32)
LANES = 128                    # packed slab width (one full lane group)


def _mxu(a, b):
    """bf16-operand matmul with f32 accumulation."""
    return jnp.dot(a.astype(MM_DTYPE), b.astype(MM_DTYPE),
                   preferred_element_type=jnp.float32)


# ------------------------------- kernel ------------------------------------

def mixhop_kernel(x_ref, a_ref, w1_ref, b1_ref, w2_ref, b2_ref, bo_ref,
                  out_ref):
    """All three hops for one batch of graphs (one grid step), VMEM-resident.

    x_ref : [1, M, 128] bf16  packed node features (lanes: hop1|hop2|hop3|0)
    a_ref : [1, M, M]   bf16  block-diagonal A_hat = A + (1+eps)*I
    w1_ref: [R, 128, 128] bf16  per-round block-diagonal first GIN linear
    b1_ref: [R, 1, 128]  f32
    w2_ref: [R, 128, 128] bf16  per-round block-diagonal second GIN linear;
                                the finishing hop's block is pre-fused with its
                                out_proj slice and routed into lanes 0:H
    b2_ref: [R, 1, 128]  f32
    bo_ref: [1, H]       f32   out_proj bias
    out_ref:[1, M, H]    f32
    """
    h = x_ref[0]                          # [M, 128] bf16 packed hop states
    a = a_ref[0]                          # [M, M]   bf16
    h_out = out_ref.shape[-1]             # H (=32)
    n_rounds = w1_ref.shape[0]

    acc = jnp.zeros((h.shape[0], h_out), jnp.float32)
    for r in range(n_rounds):             # unrolled: 3 rounds
        agg = _mxu(a, h)                                          # [M,128] f32
        z = jnp.maximum(_mxu(agg, w1_ref[r]) + b1_ref[r], 0.0)    # [M,128] f32
        hf = _mxu(z, w2_ref[r]) + b2_ref[r]                       # [M,128] f32
        # lanes 0:H of hf hold the hop that finishes this round (already fused
        # with its out_proj block); the other hops' updated states sit in their
        # own 32-lane blocks.
        acc = acc + hf[:, :h_out]
        if r + 1 < n_rounds:
            h = hf.astype(MM_DTYPE)       # keep state bf16 between matmuls

    out_ref[0] = (acc + bo_ref[...]).astype(out_ref.dtype)


@jax.jit
def mixhop_forward(xp, abd, w1r, b1r, w2r, b2r, bo):
    """xp: [S, M, 128] bf16, abd: [S, M, M] bf16 -> [S, M, H] f32."""
    s, m, lanes = xp.shape
    h_out = bo.shape[-1]
    in_specs = [
        pl.BlockSpec((1, m, lanes), lambda i: (i, 0, 0)),   # packed x (per step)
        pl.BlockSpec((1, m, m), lambda i: (i, 0, 0)),       # block-diag A_hat
        pl.BlockSpec(w1r.shape, lambda i: (0, 0, 0)),       # weights: constant
        pl.BlockSpec(b1r.shape, lambda i: (0, 0, 0)),       # index_map -> stay
        pl.BlockSpec(w2r.shape, lambda i: (0, 0, 0)),       # resident across
        pl.BlockSpec(b2r.shape, lambda i: (0, 0, 0)),       # grid steps
        pl.BlockSpec(bo.shape, lambda i: (0, 0)),
    ]
    out_specs = pl.BlockSpec((1, m, h_out), lambda i: (i, 0, 0))
    return pl.pallas_call(
        mixhop_kernel,
        out_shape=jax.ShapeDtypeStruct((s, m, h_out), jnp.float32),
        grid=(s,),
        in_specs=in_specs,
        out_specs=out_specs,
        compiler_params=pltpu.CompilerParams(
            # >= 2 steps on multi-TC parts -> both cores busy; 1 step elsewhere.
            dimension_semantics=("parallel",),
            # footprint here is ~1 MiB; default scoped VMEM is plenty.
        ),
    )(xp, abd, w1r, b1r, w2r, b2r, bo)


# --------------------------- host-side preparation -------------------------

def _guess_num_tensorcores():
    """Best-effort: how many TensorCores share one device's grid."""
    try:
        kind = jax.devices()[0].device_kind.lower()
    except Exception:
        return 1
    if "v7" in kind or "7x" in kind:
        return 2          # v7x: 2 TensorCores per chip
    if "v4" in kind or "v5p" in kind:
        return 2          # megacore parts
    return 1              # v5e / v6e: single TensorCore -> one big step


def _plan_batching(num_graphs, nodes_per_graph, max_rows=256):
    """Pick (graphs_per_step, num_steps): M ~128-256 rows, >=1 step per TC."""
    cores = _guess_num_tensorcores()
    steps = max(1, -(-(num_graphs * nodes_per_graph) // max_rows))
    if num_graphs >= cores:
        steps = max(steps, cores)
    steps = min(steps, num_graphs)
    g = -(-num_graphs // steps)
    steps = -(-num_graphs // g)
    return g, steps


def pack_inputs(x, adj, graphs_per_step, num_steps, lanes=LANES, eps=EPS):
    """Pack features into hop-lane slabs and build block-diagonal A_hat."""
    b, n, h = x.shape
    g = graphs_per_step
    bp = num_steps * g
    if bp > b:                                      # pad batch with empty graphs
        x = jnp.concatenate([x, jnp.zeros((bp - b, n, h), x.dtype)], axis=0)
        adj = jnp.concatenate([adj, jnp.zeros((bp - b, n, n), adj.dtype)], 0)
    m = g * n
    xg = x.reshape(num_steps, m, h)
    xp = jnp.zeros((num_steps, m, lanes), jnp.float32)
    for k in range(len(HOPS)):                      # replicate x per hop block
        xp = xp.at[:, :, k * h:(k + 1) * h].set(xg)
    a_hat = adj + (1.0 + eps) * jnp.eye(n, dtype=adj.dtype)
    a_hat = a_hat.reshape(num_steps, g, n, n)
    abd = jnp.zeros((num_steps, m, m), jnp.float32)
    for gi in range(g):
        abd = abd.at[:, gi * n:(gi + 1) * n, gi * n:(gi + 1) * n].set(a_hat[:, gi])
    return xp.astype(MM_DTYPE), abd.astype(MM_DTYPE)


def fuse_out_proj(w2, b2, wo):
    """W2o_k = W2_k @ Wo_k, b2o_k = b2_k @ Wo_k  (exact reassociation in f32)."""
    n_hops, h, _ = w2.shape
    w2o = jnp.stack([jnp.dot(w2[k], wo[k * h:(k + 1) * h], precision="highest")
                     for k in range(n_hops)])
    b2o = jnp.stack([jnp.dot(b2[k], wo[k * h:(k + 1) * h], precision="highest")
                     for k in range(n_hops)])
    return w2o, b2o


def build_round_weights(w1, b1, w2, b2, w2o, b2o, lanes=LANES):
    """Per-round block-diagonal weights for the packed-hop layout."""
    n_hops, h, _ = w1.shape
    assert tuple(HOPS) == tuple(range(1, n_hops + 1)), "packing assumes hops=(1..K)"
    # TODO(synk): if n_hops*h > 128 (larger hidden), fall back to a wider slab
    # or per-hop lane-padded weights instead of this single-lane-group packing.
    assert n_hops * h <= lanes
    w1r = jnp.zeros((n_hops, lanes, lanes), jnp.float32)
    b1r = jnp.zeros((n_hops, 1, lanes), jnp.float32)
    w2r = jnp.zeros((n_hops, lanes, lanes), jnp.float32)
    b2r = jnp.zeros((n_hops, 1, lanes), jnp.float32)
    for r in range(n_hops):                    # round r processes hops k >= r
        for k in range(r, n_hops):
            rows = slice(k * h, (k + 1) * h)
            w1r = w1r.at[r, rows, rows].set(w1[k])
            b1r = b1r.at[r, :, rows].set(b1[k])
            if k == r:                         # hop finishes: fused, -> lanes 0:h
                w2r = w2r.at[r, rows, 0:h].set(w2o[k])
                b2r = b2r.at[r, :, 0:h].set(b2o[k])
            else:                              # hop continues in its own block
                w2r = w2r.at[r, rows, rows].set(w2[k])
                b2r = b2r.at[r, :, rows].set(b2[k])
    return w1r.astype(MM_DTYPE), b1r, w2r.astype(MM_DTYPE), b2r


# ----------------------------- parameter setup -----------------------------

def _linear_init(key, fan_in, shape):
    # PyTorch nn.Linear default: U(-1/sqrt(fan_in), 1/sqrt(fan_in))
    bound = 1.0 / (fan_in ** 0.5)
    return jax.random.uniform(key, shape, jnp.float32, -bound, bound)


def build_params(key, hidden, n_hops):
    keys = jax.random.split(key, 4 * n_hops + 2)
    w1 = jnp.stack([_linear_init(keys[4 * k + 0], hidden, (hidden, hidden))
                    for k in range(n_hops)])
    b1 = jnp.stack([_linear_init(keys[4 * k + 1], hidden, (1, hidden))
                    for k in range(n_hops)])
    w2 = jnp.stack([_linear_init(keys[4 * k + 2], hidden, (hidden, hidden))
                    for k in range(n_hops)])
    b2 = jnp.stack([_linear_init(keys[4 * k + 3], hidden, (1, hidden))
                    for k in range(n_hops)])
    wo = _linear_init(keys[-2], hidden * n_hops, (hidden * n_hops, hidden))
    bo = _linear_init(keys[-1], hidden * n_hops, (1, hidden))
    return w1, b1, w2, b2, wo, bo


# ------------------------------- references --------------------------------

def reference_forward(x, adj, w1, b1, w2, b2, wo, bo):
    """Pure-f32 replica of MixHopConv.forward (single graph)."""
    def mm(a, b):
        return jnp.dot(a, b, precision="highest",
                       preferred_element_type=jnp.float32)
    outs = []
    for k, hop in enumerate(HOPS):
        h = x
        for _ in range(hop):
            z = mm(adj, h) + (1.0 + EPS) * h
            z = jnp.maximum(mm(z, w1[k]) + b1[k], 0.0)
            h = mm(z, w2[k]) + b2[k]
        outs.append(h)
    return mm(jnp.concatenate(outs, axis=-1), wo) + bo


def reference_forward_matched(x, a_hat, w1, b1, w2, b2, w2o, b2o, bo):
    """Same contraction order / operand dtypes as the kernel (single graph)."""
    def mm(a, b):
        return jnp.dot(a.astype(MM_DTYPE), b.astype(MM_DTYPE),
                       preferred_element_type=jnp.float32)
    out = jnp.zeros((x.shape[0], bo.shape[-1]), jnp.float32)
    for k, hop in enumerate(HOPS):
        h = x.astype(MM_DTYPE)
        for r in range(hop):
            agg = mm(a_hat, h)
            z = jnp.maximum(mm(agg, w1[k]) + b1[k], 0.0)
            if r == hop - 1:
                out = out + (mm(z, w2o[k]) + b2o[k])
            else:
                h = (mm(z, w2[k]) + b2[k]).astype(MM_DTYPE)
    return out + bo


# ----------------------------------- main -----------------------------------

if __name__ == "__main__":
    key = jax.random.PRNGKey(0)
    k_x, k_edges, k_params = jax.random.split(key, 3)

    B = 4      # graphs per batch
    N = 16     # nodes per graph
    H = 32     # model hidden size
    E = 40     # directed edges per graph

    # Node features and per-graph random directed edge lists [2, E],
    # densified to A[dst, src] so that (A @ h)[i] = sum_{j->i} h_j.
    x = jax.random.normal(k_x, (B, N, H), jnp.float32)
    adjs = []
    for bkey in jax.random.split(k_edges, B):
        ei = jax.random.randint(bkey, (2, E), 0, N, jnp.int32)
        src, dst = ei[0], ei[1]
        adjs.append(jnp.zeros((N, N), jnp.float32).at[dst, src].add(1.0))
    adj = jnp.stack(adjs)

    # Parameters (PyTorch-style init), then kernel-side fused / packed params.
    w1, b1, w2, b2, wo, bo = build_params(k_params, H, K)
    w2o, b2o = fuse_out_proj(w2, b2, wo)
    w1r, b1r, w2r, b2r = build_round_weights(w1, b1, w2, b2, w2o, b2o)

    g_per_step, n_steps = _plan_batching(B, N)
    xp, abd = pack_inputs(x, adj, g_per_step, n_steps)

    out_flat = mixhop_forward(xp, abd, w1r, b1r, w2r, b2r, bo)
    out_flat = jax.block_until_ready(out_flat)
    out = out_flat.reshape(n_steps * g_per_step, N, H)[:B]   # drop padded graphs

    # References: (a) pure f32 semantics (loose tol; kernel uses bf16 MXU
    # operands), (b) matched precision & contraction order (tight tol).
    a_hat = adj + (1.0 + EPS) * jnp.eye(N, dtype=adj.dtype)
    ref_f32 = jnp.stack([reference_forward(x[g], adj[g], w1, b1, w2, b2, wo, bo)
                         for g in range(B)])
    ref_mp = jnp.stack([reference_forward_matched(x[g], a_hat[g], w1, b1, w2,
                                                  b2, w2o, b2o, bo)
                        for g in range(B)])

    assert out.shape == (B, N, H)
    scale = float(jnp.maximum(jnp.max(jnp.abs(ref_f32)), 1.0))
    err_f32 = float(jnp.max(jnp.abs(out - ref_f32))) / scale
    assert err_f32 < 5e-2, f"mismatch vs f32 reference: {err_f32}"
    assert bool(jnp.allclose(out, ref_mp, atol=1e-2, rtol=1e-2)), \
        "mismatch vs matched-precision reference"

    print("KERNEL_OK")
</pallas_src>

<mosaic_0001>
module attributes {stable_mosaic.version = 11 : i64} {
  func.func @mixhop_kernel(%arg0: i32, %arg1: memref<1x64x128xbf16, #tpu.memory_space<vmem>>, %arg2: memref<1x64x64xbf16, #tpu.memory_space<vmem>>, %arg3: memref<3x128x128xbf16, #tpu.memory_space<vmem>>, %arg4: memref<3x1x128xf32, #tpu.memory_space<vmem>>, %arg5: memref<3x128x128xbf16, #tpu.memory_space<vmem>>, %arg6: memref<3x1x128xf32, #tpu.memory_space<vmem>>, %arg7: memref<1x32xf32, #tpu.memory_space<vmem>>, %arg8: memref<1x64x32xf32, #tpu.memory_space<vmem>>) attributes {dimension_semantics = [#tpu.dimension_semantics<parallel>], iteration_bounds = array<i64: 1>, scalar_prefetch = 0 : i64, scratch_operands = 0 : i64, tpu.core_type = #tpu.core_type<tc>, window_params = [{transform_indices = @transform_0, window_bounds = array<i64: 1, 64, 128>}, {transform_indices = @transform_1, window_bounds = array<i64: 1, 64, 64>}, {pipeline_mode = #tpu.pipeline_mode<synchronous>, transform_indices = @transform_2, window_bounds = array<i64: 3, 128, 128>}, {pipeline_mode = #tpu.pipeline_mode<synchronous>, transform_indices = @transform_3, window_bounds = array<i64: 3, 1, 128>}, {pipeline_mode = #tpu.pipeline_mode<synchronous>, transform_indices = @transform_4, window_bounds = array<i64: 3, 128, 128>}, {pipeline_mode = #tpu.pipeline_mode<synchronous>, transform_indices = @transform_5, window_bounds = array<i64: 3, 1, 128>}, {pipeline_mode = #tpu.pipeline_mode<synchronous>, transform_indices = @transform_6, window_bounds = array<i64: 1, 32>}, {transform_indices = @transform_7, window_bounds = array<i64: 1, 64, 32>}]} {
    %c0 = arith.constant 0 : index
    %c0_0 = arith.constant 0 : index
    %c0_1 = arith.constant 0 : index
    %0 = vector.load %arg1[%c0, %c0_0, %c0_1] : memref<1x64x128xbf16, #tpu.memory_space<vmem>>, vector<1x64x128xbf16>
    %1 = vector.shape_cast %0 : vector<1x64x128xbf16> to vector<64x128xbf16>
    %c0_2 = arith.constant 0 : index
    %c0_3 = arith.constant 0 : index
    %c0_4 = arith.constant 0 : index
    %2 = vector.load %arg2[%c0_2, %c0_3, %c0_4] : memref<1x64x64xbf16, #tpu.memory_space<vmem>>, vector<1x64x64xbf16>
    %3 = vector.shape_cast %2 : vector<1x64x64xbf16> to vector<64x64xbf16>
    %cst = arith.constant 0.000000e+00 : f32
    %4 = vector.broadcast %cst : f32 to vector<64x32xf32>
    %cst_5 = arith.constant dense<0.000000e+00> : vector<64x128xf32>
    %5 = tpu.matmul %3, %1, %cst_5 {dimension_numbers = #tpu.dot_dimension_numbers<[1], [0], [0], [1], [0, 0, 1, 1], [], []>} : vector<64x64xbf16>, vector<64x128xbf16>, vector<64x128xf32> -> vector<64x128xf32>
    %c0_6 = arith.constant 0 : index
    %c0_7 = arith.constant 0 : index
    %c0_8 = arith.constant 0 : index
    %6 = vector.load %arg3[%c0_6, %c0_7, %c0_8] : memref<3x128x128xbf16, #tpu.memory_space<vmem>>, vector<1x128x128xbf16>
    %7 = vector.shape_cast %6 : vector<1x128x128xbf16> to vector<128x128xbf16>
    %8 = arith.truncf %5 : vector<64x128xf32> to vector<64x128xbf16>
    %cst_9 = arith.constant dense<0.000000e+00> : vector<64x128xf32>
    %9 = tpu.matmul %8, %7, %cst_9 {dimension_numbers = #tpu.dot_dimension_numbers<[1], [0], [0], [1], [0, 0, 1, 1], [], []>} : vector<64x128xbf16>, vector<128x128xbf16>, vector<64x128xf32> -> vector<64x128xf32>
    %c0_10 = arith.constant 0 : index
    %c0_11 = arith.constant 0 : index
    %c0_12 = arith.constant 0 : index
    %10 = vector.load %arg4[%c0_10, %c0_11, %c0_12] : memref<3x1x128xf32, #tpu.memory_space<vmem>>, vector<1x1x128xf32>
    %11 = vector.shape_cast %10 : vector<1x1x128xf32> to vector<1x128xf32>
    %12 = vector.broadcast %11 : vector<1x128xf32> to vector<64x128xf32>
    %13 = arith.addf %9, %12 : vector<64x128xf32>
    %cst_13 = arith.constant 0.000000e+00 : f32
    %14 = vector.broadcast %cst_13 : f32 to vector<64x128xf32>
    %15 = arith.maximumf %13, %14 : vector<64x128xf32>
    %c0_14 = arith.constant 0 : index
    %c0_15 = arith.constant 0 : index
    %c0_16 = arith.constant 0 : index
    %16 = vector.load %arg5[%c0_14, %c0_15, %c0_16] : memref<3x128x128xbf16, #tpu.memory_space<vmem>>, vector<1x128x128xbf16>
    %17 = vector.shape_cast %16 : vector<1x128x128xbf16> to vector<128x128xbf16>
    %18 = arith.truncf %15 : vector<64x128xf32> to vector<64x128xbf16>
    %cst_17 = arith.constant dense<0.000000e+00> : vector<64x128xf32>
    %19 = tpu.matmul %18, %17, %cst_17 {dimension_numbers = #tpu.dot_dimension_numbers<[1], [0], [0], [1], [0, 0, 1, 1], [], []>} : vector<64x128xbf16>, vector<128x128xbf16>, vector<64x128xf32> -> vector<64x128xf32>
    %c0_18 = arith.constant 0 : index
    %c0_19 = arith.constant 0 : index
    %c0_20 = arith.constant 0 : index
    %20 = vector.load %arg6[%c0_18, %c0_19, %c0_20] : memref<3x1x128xf32, #tpu.memory_space<vmem>>, vector<1x1x128xf32>
    %21 = vector.shape_cast %20 : vector<1x1x128xf32> to vector<1x128xf32>
    %22 = vector.broadcast %21 : vector<1x128xf32> to vector<64x128xf32>
    %23 = arith.addf %19, %22 : vector<64x128xf32>
    %24 = vector.extract_strided_slice %23 {offsets = [0, 0], sizes = [64, 32], strides = [1, 1]} : vector<64x128xf32> to vector<64x32xf32>
    %25 = arith.addf %4, %24 : vector<64x32xf32>
    %26 = arith.truncf %23 : vector<64x128xf32> to vector<64x128xbf16>
    %cst_21 = arith.constant dense<0.000000e+00> : vector<64x128xf32>
    %27 = tpu.matmul %3, %26, %cst_21 {dimension_numbers = #tpu.dot_dimension_numbers<[1], [0], [0], [1], [0, 0, 1, 1], [], []>} : vector<64x64xbf16>, vector<64x128xbf16>, vector<64x128xf32> -> vector<64x128xf32>
    %c1 = arith.constant 1 : index
    %c0_22 = arith.constant 0 : index
    %c0_23 = arith.constant 0 : index
    %28 = vector.load %arg3[%c1, %c0_22, %c0_23] : memref<3x128x128xbf16, #tpu.memory_space<vmem>>, vector<1x128x128xbf16>
    %29 = vector.shape_cast %28 : vector<1x128x128xbf16> to vector<128x128xbf16>
    %30 = arith.truncf %27 : vector<64x128xf32> to vector<64x128xbf16>
    %cst_24 = arith.constant dense<0.000000e+00> : vector<64x128xf32>
    %31 = tpu.matmul %30, %29, %cst_24 {dimension_numbers = #tpu.dot_dimension_numbers<[1], [0], [0], [1], [0, 0, 1, 1], [], []>} : vector<64x128xbf16>, vector<128x128xbf16>, vector<64x128xf32> -> vector<64x128xf32>
    %c1_25 = arith.constant 1 : index
    %c0_26 = arith.constant 0 : index
    %c0_27 = arith.constant 0 : index
    %32 = vector.load %arg4[%c1_25, %c0_26, %c0_27] : memref<3x1x128xf32, #tpu.memory_space<vmem>>, vector<1x1x128xf32>
    %33 = vector.shape_cast %32 : vector<1x1x128xf32> to vector<1x128xf32>
    %34 = vector.broadcast %33 : vector<1x128xf32> to vector<64x128xf32>
    %35 = arith.addf %31, %34 : vector<64x128xf32>
    %cst_28 = arith.constant 0.000000e+00 : f32
    %36 = vector.broadcast %cst_28 : f32 to vector<64x128xf32>
    %37 = arith.maximumf %35, %36 : vector<64x128xf32>
    %c1_29 = arith.constant 1 : index
    %c0_30 = arith.constant 0 : index
    %c0_31 = arith.constant 0 : index
    %38 = vector.load %arg5[%c1_29, %c0_30, %c0_31] : memref<3x128x128xbf16, #tpu.memory_space<vmem>>, vector<1x128x128xbf16>
    %39 = vector.shape_cast %38 : vector<1x128x128xbf16> to vector<128x128xbf16>
    %40 = arith.truncf %37 : vector<64x128xf32> to vector<64x128xbf16>
    %cst_32 = arith.constant dense<0.000000e+00> : vector<64x128xf32>
    %41 = tpu.matmul %40, %39, %cst_32 {dimension_numbers = #tpu.dot_dimension_numbers<[1], [0], [0], [1], [0, 0, 1, 1], [], []>} : vector<64x128xbf16>, vector<128x128xbf16>, vector<64x128xf32> -> vector<64x128xf32>
    %c1_33 = arith.constant 1 : index
    %c0_34 = arith.constant 0 : index
    %c0_35 = arith.constant 0 : index
    %42 = vector.load %arg6[%c1_33, %c0_34, %c0_35] : memref<3x1x128xf32, #tpu.memory_space<vmem>>, vector<1x1x128xf32>
    %43 = vector.shape_cast %42 : vector<1x1x128xf32> to vector<1x128xf32>
    %44 = vector.broadcast %43 : vector<1x128xf32> to vector<64x128xf32>
    %45 = arith.addf %41, %44 : vector<64x128xf32>
    %46 = vector.extract_strided_slice %45 {offsets = [0, 0], sizes = [64, 32], strides = [1, 1]} : vector<64x128xf32> to vector<64x32xf32>
    %47 = arith.addf %25, %46 : vector<64x32xf32>
    %48 = arith.truncf %45 : vector<64x128xf32> to vector<64x128xbf16>
    %cst_36 = arith.constant dense<0.000000e+00> : vector<64x128xf32>
    %49 = tpu.matmul %3, %48, %cst_36 {dimension_numbers = #tpu.dot_dimension_numbers<[1], [0], [0], [1], [0, 0, 1, 1], [], []>} : vector<64x64xbf16>, vector<64x128xbf16>, vector<64x128xf32> -> vector<64x128xf32>
    %c2 = arith.constant 2 : index
    %c0_37 = arith.constant 0 : index
    %c0_38 = arith.constant 0 : index
    %50 = vector.load %arg3[%c2, %c0_37, %c0_38] : memref<3x128x128xbf16, #tpu.memory_space<vmem>>, vector<1x128x128xbf16>
    %51 = vector.shape_cast %50 : vector<1x128x128xbf16> to vector<128x128xbf16>
    %52 = arith.truncf %49 : vector<64x128xf32> to vector<64x128xbf16>
    %cst_39 = arith.constant dense<0.000000e+00> : vector<64x128xf32>
    %53 = tpu.matmul %52, %51, %cst_39 {dimension_numbers = #tpu.dot_dimension_numbers<[1], [0], [0], [1], [0, 0, 1, 1], [], []>} : vector<64x128xbf16>, vector<128x128xbf16>, vector<64x128xf32> -> vector<64x128xf32>
    %c2_40 = arith.constant 2 : index
    %c0_41 = arith.constant 0 : index
    %c0_42 = arith.constant 0 : index
    %54 = vector.load %arg4[%c2_40, %c0_41, %c0_42] : memref<3x1x128xf32, #tpu.memory_space<vmem>>, vector<1x1x128xf32>
    %55 = vector.shape_cast %54 : vector<1x1x128xf32> to vector<1x128xf32>
    %56 = vector.broadcast %55 : vector<1x128xf32> to vector<64x128xf32>
    %57 = arith.addf %53, %56 : vector<64x128xf32>
    %cst_43 = arith.constant 0.000000e+00 : f32
    %58 = vector.broadcast %cst_43 : f32 to vector<64x128xf32>
    %59 = arith.maximumf %57, %58 : vector<64x128xf32>
    %c2_44 = arith.constant 2 : index
    %c0_45 = arith.constant 0 : index
    %c0_46 = arith.constant 0 : index
    %60 = vector.load %arg5[%c2_44, %c0_45, %c0_46] : memref<3x128x128xbf16, #tpu.memory_space<vmem>>, vector<1x128x128xbf16>
    %61 = vector.shape_cast %60 : vector<1x128x128xbf16> to vector<128x128xbf16>
    %62 = arith.truncf %59 : vector<64x128xf32> to vector<64x128xbf16>
    %cst_47 = arith.constant dense<0.000000e+00> : vector<64x128xf32>
    %63 = tpu.matmul %62, %61, %cst_47 {dimension_numbers = #tpu.dot_dimension_numbers<[1], [0], [0], [1], [0, 0, 1, 1], [], []>} : vector<64x128xbf16>, vector<128x128xbf16>, vector<64x128xf32> -> vector<64x128xf32>
    %c2_48 = arith.constant 2 : index
    %c0_49 = arith.constant 0 : index
    %c0_50 = arith.constant 0 : index
    %64 = vector.load %arg6[%c2_48, %c0_49, %c0_50] : memref<3x1x128xf32, #tpu.memory_space<vmem>>, vector<1x1x128xf32>
    %65 = vector.shape_cast %64 : vector<1x1x128xf32> to vector<1x128xf32>
    %66 = vector.broadcast %65 : vector<1x128xf32> to vector<64x128xf32>
    %67 = arith.addf %63, %66 : vector<64x128xf32>
    %68 = vector.extract_strided_slice %67 {offsets = [0, 0], sizes = [64, 32], strides = [1, 1]} : vector<64x128xf32> to vector<64x32xf32>
    %69 = arith.addf %47, %68 : vector<64x32xf32>
    %c0_51 = arith.constant 0 : index
    %c0_52 = arith.constant 0 : index
    %70 = vector.load %arg7[%c0_51, %c0_52] : memref<1x32xf32, #tpu.memory_space<vmem>>, vector<1x32xf32>
    %71 = vector.broadcast %70 : vector<1x32xf32> to vector<64x32xf32>
    %72 = arith.addf %69, %71 : vector<64x32xf32>
    %c0_53 = arith.constant 0 : index
    %c0_54 = arith.constant 0 : index
    %c0_55 = arith.constant 0 : index
    %73 = vector.load %arg8[%c0_53, %c0_54, %c0_55] : memref<1x64x32xf32, #tpu.memory_space<vmem>>, vector<1x64x32xf32>
    %74 = vector.shape_cast %73 : vector<1x64x32xf32> to vector<64x32xf32>
    %75 = vector.shape_cast %72 : vector<64x32xf32> to vector<1x64x32xf32>
    tpu.vector_store %arg8[%c0_53, %c0_54, %c0_55], %75 {strides = array<i32>} : memref<1x64x32xf32, #tpu.memory_space<vmem>>, vector<1x64x32xf32>,
    return
  }
  func.func @transform_0(%arg0: i32) -> (i32, i32, i32) {
    %c0_i32 = arith.constant 0 : i32
    %c0_i32_0 = arith.constant 0 : i32
    %c0_i32_1 = arith.constant 0 : i32
    return %arg0, %c0_i32, %c0_i32_0 : i32, i32, i32
  }
  func.func @transform_1(%arg0: i32) -> (i32, i32, i32) {
    %c0_i32 = arith.constant 0 : i32
    %c0_i32_0 = arith.constant 0 : i32
    %c0_i32_1 = arith.constant 0 : i32
    return %arg0, %c0_i32, %c0_i32_0 : i32, i32, i32
  }
  func.func @transform_2(%arg0: i32) -> (i32, i32, i32) {
    %c0_i32 = arith.constant 0 : i32
    %c0_i32_0 = arith.constant 0 : i32
    %c0_i32_1 = arith.constant 0 : i32
    %c0_i32_2 = arith.constant 0 : i32
    return %c0_i32, %c0_i32_0, %c0_i32_1 : i32, i32, i32
  }
  func.func @transform_3(%arg0: i32) -> (i32, i32, i32) {
    %c0_i32 = arith.constant 0 : i32
    %c0_i32_0 = arith.constant 0 : i32
    %c0_i32_1 = arith.constant 0 : i32
    %c0_i32_2 = arith.constant 0 : i32
    return %c0_i32, %c0_i32_0, %c0_i32_1 : i32, i32, i32
  }
  func.func @transform_4(%arg0: i32) -> (i32, i32, i32) {
    %c0_i32 = arith.constant 0 : i32
    %c0_i32_0 = arith.constant 0 : i32
    %c0_i32_1 = arith.constant 0 : i32
    %c0_i32_2 = arith.constant 0 : i32
    return %c0_i32, %c0_i32_0, %c0_i32_1 : i32, i32, i32
  }
  func.func @transform_5(%arg0: i32) -> (i32, i32, i32) {
    %c0_i32 = arith.constant 0 : i32
    %c0_i32_0 = arith.constant 0 : i32
    %c0_i32_1 = arith.constant 0 : i32
    %c0_i32_2 = arith.constant 0 : i32
    return %c0_i32, %c0_i32_0, %c0_i32_1 : i32, i32, i32
  }
  func.func @transform_6(%arg0: i32) -> (i32, i32) {
    %c0_i32 = arith.constant 0 : i32
    %c0_i32_0 = arith.constant 0 : i32
    %c0_i32_1 = arith.constant 0 : i32
    return %c0_i32, %c0_i32_0 : i32, i32
  }
  func.func @transform_7(%arg0: i32) -> (i32, i32, i32) {
    %c0_i32 = arith.constant 0 : i32
    %c0_i32_0 = arith.constant 0 : i32
    %c0_i32_1 = arith.constant 0 : i32
    return %arg0, %c0_i32, %c0_i32_0 : i32, i32, i32
  }
}

</mosaic_0001>

<llo_original>
// kernel: mixhop_forward.1
$region0: #{mixhop_forward.1}
  #allocation0 [shape = 'u32[]', space=smem, size = 0x4, offset = 0x4, fixed_abs, tag = 'smem constant byte address 0x4 - core index']
  #allocation1 [shape = 'u32[144,128]{1,0:T(1,128)}', space=vmem, size = 0x12000, scoped, tag = 'internal scratch']
  %s0 = inlined_call_operand.hbm [shape: bf16[1,64,128], index: 0, kind: input, shape index: {}]
  %s1 = inlined_call_operand.hbm [shape: bf16[1,64,64], index: 1, kind: input, shape index: {}]
  %s2 = inlined_call_operand.hbm [shape: bf16[3,128,128], index: 2, kind: input, shape index: {}]
  %s3 = inlined_call_operand.vmem [shape: f32[3,1,128], index: 3, kind: input, shape index: {}]
  %s4 = inlined_call_operand.hbm [shape: bf16[3,128,128], index: 4, kind: input, shape index: {}]
  %s5 = inlined_call_operand.vmem [shape: f32[3,1,128], index: 5, kind: input, shape index: {}]
  %s6 = inlined_call_operand.vmem [shape: f32[1,32], index: 6, kind: input, shape index: {}]
  %s7 = inlined_call_operand.vmem [shape: f32[1,64,32], index: 7, kind: output, shape index: {}]
  %s8 = sld [smem:[#allocation0]]
  $region54: #{mixhop_forward.1} parent=0
    _
  %s10 = ssub.s32 1, %s8
  %s11 = scalar_select 0, %s10, %s8
  $region1: #{mixhop_forward.1} parent=0
    #allocation2 [shape = 'u8[16384]{0}', space=vmem, size = 0x4000, scoped, tag = 'input window, operand 0, single buffered']
    #allocation3 [shape = 's32[1]{0}', space=sflag, size = 0x4, scoped, tag = 'scoped memory for mixhop_forward.1']
    #allocation4 [shape = 'u8[16384]{0}', space=vmem, size = 0x4000, scoped, tag = 'input window, operand 1, single buffered']
    #allocation5 [shape = 's32[1]{0}', space=sflag, size = 0x4, scoped, tag = 'scoped memory for mixhop_forward.1']
    #allocation6 [shape = 'u8[98304]{0}', space=vmem, size = 0x18000, scoped, tag = 'input window, operand 2, single buffered']
    #allocation7 [shape = 'u8[98304]{0}', space=vmem, size = 0x18000, scoped, tag = 'input window, operand 4, single buffered']
    #allocation8 [shape = 's32[1]{0}', space=sflag, size = 0x4, scoped, tag = 'scoped memory for mixhop_forward.1']
    %12 = vsyncpa [#allocation3], 0
    %13 = vsyncpa [#allocation5], 0
    %14 = vsyncpa [#allocation8], 0
    // Predicated region
    $region2: #{mixhop_forward.1} parent=1 // pred_check
      _
    $region3: #{mixhop_forward.1} parent=1 // pred_check_branch
      %16 = sbr.rel (0) target = $region5
    $region4: #{mixhop_forward.1} parent=1 // pred_region
      %s18 = ssub.s32 512, 512
      %19 = vsyncadd [#allocation3], %s18
      %s20 = sshll.u32 [#allocation2], 4
      %s21 = int_to_ptr.vmem [resolvable:$true] %s20
      %26 = dma.hbm_to_vmem [thread:$0]  %s0, 512, %s21, [#allocation3], 64, 64, 4
    $region5: #{mixhop_forward.1} parent=1 // pred_fallthru
      _
    // Predicated region
    $region6: #{mixhop_forward.1} parent=1 // pred_check
      _
    $region7: #{mixhop_forward.1} parent=1 // pred_check_branch
      %28 = sbr.rel (0) target = $region9
    $region8: #{mixhop_forward.1} parent=1 // pred_region
      %s30 = ssub.s32 512, 512
      %31 = vsyncadd [#allocation5], %s30
      %s32 = sshll.u32 [#allocation4], 4
      %s33 = int_to_ptr.vmem [resolvable:$true] %s32
      %38 = dma.hbm_to_vmem [thread:$0]  %s1, 512, %s33, [#allocation5], 64, 64, 4
    $region9: #{mixhop_forward.1} parent=1 // pred_fallthru
      _
    // Predicated region
    $region10: #{mixhop_forward.1} parent=1 // pred_check
      _
    $region11: #{mixhop_forward.1} parent=1 // pred_check_branch
      %40 = sbr.rel (0) target = $region13
    $region12: #{mixhop_forward.1} parent=1 // pred_region
      %s42 = ssub.s32 3072, 3072
      %43 = vsyncadd [#allocation5], %s42
      %s44 = sshll.u32 [#allocation6], 4
      %s45 = int_to_ptr.vmem [resolvable:$true] %s44
      %50 = dma.hbm_to_vmem [thread:$0]  %s2, 3072, %s45, [#allocation5], 64, 64, 4
    $region13: #{mixhop_forward.1} parent=1 // pred_fallthru
      _
    // Predicated region
    $region14: #{mixhop_forward.1} parent=1 // pred_check
      _
    $region15: #{mixhop_forward.1} parent=1 // pred_check_branch
      %52 = sbr.rel (0) target = $region17
    $region16: #{mixhop_forward.1} parent=1 // pred_region
      _
    $region17: #{mixhop_forward.1} parent=1 // pred_fallthru
      _
    // Predicated region
    $region18: #{mixhop_forward.1} parent=1 // pred_check
      _
    $region19: #{mixhop_forward.1} parent=1 // pred_check_branch
      %54 = sbr.rel (0) target = $region21
    $region20: #{mixhop_forward.1} parent=1 // pred_region
      %s56 = ssub.s32 3072, 3072
      %57 = vsyncadd [#allocation8], %s56
      %s58 = sshll.u32 [#allocation7], 4
      %s59 = int_to_ptr.vmem [resolvable:$true] %s58
      %64 = dma.hbm_to_vmem [thread:$0]  %s4, 3072, %s59, [#allocation8], 64, 64, 4
    $region21: #{mixhop_forward.1} parent=1 // pred_fallthru
      _
    // Predicated region
    $region22: #{mixhop_forward.1} parent=1 // pred_check
      _
    $region23: #{mixhop_forward.1} parent=1 // pred_check_branch
      %66 = sbr.rel (0) target = $region25
    $region24: #{mixhop_forward.1} parent=1 // pred_region
      _
    $region25: #{mixhop_forward.1} parent=1 // pred_fallthru
      _
    // Predicated region
    $region26: #{mixhop_forward.1} parent=1 // pred_check
      _
    $region27: #{mixhop_forward.1} parent=1 // pred_check_branch
      %68 = sbr.rel (0) target = $region29
    $region28: #{mixhop_forward.1} parent=1 // pred_region
      _
    $region29: #{mixhop_forward.1} parent=1 // pred_fallthru
      _
    // Predicated region
    $region30: #{mixhop_forward.1} parent=1 // pred_check
      _
    $region31: #{mixhop_forward.1} parent=1 // pred_check_branch
      %70 = sbr.rel (0) target = $region33
    $region32: #{mixhop_forward.1} parent=1 // pred_region
      %71 = dma.done [#allocation3], 512
    $region33: #{mixhop_forward.1} parent=1 // pred_fallthru
      _
    // Predicated region
    $region34: #{mixhop_forward.1} parent=1 // pred_check
      _
    $region35: #{mixhop_forward.1} parent=1 // pred_check_branch
      %73 = sbr.rel (0) target = $region37
    $region36: #{mixhop_forward.1} parent=1 // pred_region
      %74 = dma.done [#allocation5], 512
    $region37: #{mixhop_forward.1} parent=1 // pred_fallthru
      _
    // Predicated region
    $region38: #{mixhop_forward.1} parent=1 // pred_check
      _
    $region39: #{mixhop_forward.1} parent=1 // pred_check_branch
      %76 = sbr.rel (0) target = $region41
    $region40: #{mixhop_forward.1} parent=1 // pred_region
      %77 = dma.done [#allocation5], 3072
    $region41: #{mixhop_forward.1} parent=1 // pred_fallthru
      _
    // Predicated region
    $region42: #{mixhop_forward.1} parent=1 // pred_check
      _
    $region43: #{mixhop_forward.1} parent=1 // pred_check_branch
      %79 = sbr.rel (0) target = $region45
    $region44: #{mixhop_forward.1} parent=1 // pred_region
      %80 = dma.done [#allocation8], 3072
    $region45: #{mixhop_forward.1} parent=1 // pred_fallthru
      _
    %v82 = vld [vmem:[#allocation2] sm:$0xf]
    %v83 = vld [vmem:[#allocation2 + $0x4] sm:$0xf]
    %v84 = vld [vmem:[#allocation2 + $0x8] sm:$0xf]
    %v85 = vld [vmem:[#allocation2 + $0xc] sm:$0xf]
    %v86 = vld [vmem:[#allocation2 + $0x10] sm:$0xf]
    %v87 = vld [vmem:[#allocation2 + $0x14] sm:$0xf]
    %v88 = vld [vmem:[#allocation2 + $0x18] sm:$0xf]
    %v89 = vld [vmem:[#allocation2 + $0x1c] sm:$0xf]
    %v90 = vld [vmem:[#allocation4] sm:$0xf]
    %v91 = vld [vmem:[#allocation4 + $0x4] sm:$0xf]
    %v92 = vld [vmem:[#allocation4 + $0x8] sm:$0xf]
    %v93 = vld [vmem:[#allocation4 + $0xc] sm:$0xf]
    %v94 = vld [vmem:[#allocation4 + $0x10] sm:$0xf]
    %v95 = vld [vmem:[#allocation4 + $0x14] sm:$0xf]
    %v96 = vld [vmem:[#allocation4 + $0x18] sm:$0xf]
    %v97 = vld [vmem:[#allocation4 + $0x1c] sm:$0xf]
    %v106 = vunpack.c.l.b16 %v90
    %v107 = vunpack.c.l.b16 %v91
    %v108 = vunpack.c.l.b16 %v92
    %v109 = vunpack.c.l.b16 %v93
    %v110 = vunpack.c.l.b16 %v94
    %v111 = vunpack.c.l.b16 %v95
    %v112 = vunpack.c.l.b16 %v96
    %v113 = vunpack.c.l.b16 %v97
    %v114 = vpack.c.b16 %v107, %v106
    %v115 = vpack.c.b16 %v109, %v108
    %v116 = vpack.c.b16 %v111, %v110
    %v117 = vpack.c.b16 %v113, %v112
    %v126 = vunpack.c.l.b16 %v82
    %v127 = vunpack.c.l.b16 %v83
    %v128 = vunpack.c.l.b16 %v84
    %v129 = vunpack.c.l.b16 %v85
    %v130 = vunpack.c.l.b16 %v86
    %v131 = vunpack.c.l.b16 %v87
    %v132 = vunpack.c.l.b16 %v88
    %v133 = vunpack.c.l.b16 %v89
    %v134 = vpack.c.b16 %v127, %v126
    %v135 = vpack.c.b16 %v129, %v128
    %v136 = vpack.c.b16 %v131, %v130
    %v137 = vpack.c.b16 %v133, %v132
    %vm142 = vcmask 523264
    %v144 = vsel %vm142, %v114, 0
    %v147 = vsel %vm142, %v115, 0
    %v150 = vsel %vm142, %v116, 0
    %v153 = vsel %vm142, %v117, 0
    %155 = vmatprep.subr.bf16.mxu0 0
    %156 = vmatpush1.bf16.msra.mxu0 %v134
    %157 = vmatprep.subr.bf16.mxu0 0
    %158 = vmatpush1.bf16.msra.mxu0 %v135
    %159 = vmatprep.subr.bf16.mxu0 0
    %160 = vmatpush1.bf16.msra.mxu0 %v136
    %161 = vmatprep.subr.bf16.mxu0 0
    %162 = vmatpush1.bf16.msra.mxu0 %v137
    %163 = vmatprep.subr.bf16.mxu0 0
    %164 = vmatpush1.bf16.msra.mxu0 0
    %165 = vmatprep.subr.bf16.mxu0 0
    %166 = vmatpush1.bf16.msra.mxu0 0
    %167 = vmatprep.subr.bf16.mxu0 0
    %168 = vmatpush1.bf16.msra.mxu0 0
    %169 = vmatprep.subr.bf16.mxu0 0
    %170 = vmatpush1.bf16.msra.mxu0 0
    %171 = vmatprep.subr.bf16.mxu0 0
    %172 = vmatpush1.bf16.msra.mxu0 0
    %173 = vmatprep.subr.bf16.mxu0 0
    %174 = vmatpush1.bf16.msra.mxu0 0
    %175 = vmatprep.subr.bf16.mxu0 0
    %176 = vmatpush1.bf16.msra.mxu0 0
    %177 = vmatprep.subr.bf16.mxu0 0
    %178 = vmatpush1.bf16.msra.mxu0 0
    %179 = vmatprep.subr.bf16.mxu0 0
    %180 = vmatpush1.bf16.msra.mxu0 0
    %181 = vmatprep.subr.bf16.mxu0 0
    %182 = vmatpush1.bf16.msra.mxu0 0
    %183 = vmatprep.subr.bf16.mxu0 0
    %184 = vmatpush1.bf16.msra.mxu0 0
    %185 = vmatprep.subr.bf16.mxu0 0
    %186 = vmatpush1.bf16.msra.mxu0 0
    %187 = vmatprep.mubr.bf16.mxu0 0
    %188 = vmatmul.mubr.bf16.gmra.mrb[0].mxu0 %v144
    %v189 = vpop.f32.mrb[0].mxu0
    %v190 = vadd.f32 0.0, %v189
    %v191 = vpop.f32.mrb[0].mxu0
    %v192 = vpop.f32.mrb[0].mxu0
    %v193 = vadd.f32 0.0, %v192
    %v194 = vpop.f32.mrb[0].mxu0
    %195 = vmatprep.mubr.bf16.mxu0 0
    %196 = vmatmul.mubr.bf16.gmra.mrb[0].mxu0 %v147
    %v197 = vpop.f32.mrb[0].mxu0
    %v198 = vadd.f32 0.0, %v197
    %v199 = vpop.f32.mrb[0].mxu0
    %v200 = vpop.f32.mrb[0].mxu0
    %v201 = vadd.f32 0.0, %v200
    %v202 = vpop.f32.mrb[0].mxu0
    %203 = vmatprep.mubr.bf16.mxu0 0
    %204 = vmatmul.mubr.bf16.gmra.mrb[0].mxu0 %v150
    %v205 = vpop.f32.mrb[0].mxu0
    %v206 = vadd.f32 0.0, %v205
    %v207 = vpop.f32.mrb[0].mxu0
    %v208 = vpop.f32.mrb[0].mxu0
    %v209 = vadd.f32 0.0, %v208
    %v210 = vpop.f32.mrb[0].mxu0
    %211 = vmatprep.mubr.bf16.mxu0 0
    %212 = vmatmul.mubr.bf16.gmra.mrb[0].mxu0 %v153
    %v213 = vpop.f32.mrb[0].mxu0
    %v214 = vadd.f32 0.0, %v213
    %v215 = vpop.f32.mrb[0].mxu0
    %v216 = vpop.f32.mrb[0].mxu0
    %v217 = vadd.f32 0.0, %v216
    %v218 = vpop.f32.mrb[0].mxu0
    %219 = vdwg.mxu0
    %v220 = vld [vmem:[#allocation6] sm:$0xf]
    %v221 = vld [vmem:[#allocation6 + $0x4] sm:$0xf]
    %v222 = vld [vmem:[#allocation6 + $0x8] sm:$0xf]
    %v223 = vld [vmem:[#allocation6 + $0xc] sm:$0xf]
    %v224 = vld [vmem:[#allocation6 + $0x10] sm:$0xf]
    %v225 = vld [vmem:[#allocation6 + $0x14] sm:$0xf]
    %v226 = vld [vmem:[#allocation6 + $0x18] sm:$0xf]
    %v227 = vld [vmem:[#allocation6 + $0x1c] sm:$0xf]
    %v228 = vld [vmem:[#allocation6 + $0x20] sm:$0xf]
    %v229 = vld [vmem:[#allocation6 + $0x24] sm:$0xf]
    %v230 = vld [vmem:[#allocation6 + $0x28] sm:$0xf]
    %v231 = vld [vmem:[#allocation6 + $0x2c] sm:$0xf]
    %v232 = vld [vmem:[#allocation6 + $0x30] sm:$0xf]
    %v233 = vld [vmem:[#allocation6 + $0x34] sm:$0xf]
    %v234 = vld [vmem:[#allocation6 + $0x38] sm:$0xf]
    %v235 = vld [vmem:[#allocation6 + $0x3c] sm:$0xf]
    %v236 = vpack.c.bf16 %v193, %v190
    %v237 = vpack.c.bf16 %v201, %v198
    %v238 = vpack.c.bf16 %v209, %v206
    %v239 = vpack.c.bf16 %v217, %v214
    %v240 = vld [vmem:[%s3] sm:$0x1]
    %v242 = vlaneseq
    %v243 = vshrl.u32 %v242, 7
    %v244 = vsub.s32 0, %v243
    %v245 = vrot.slane %v240, %v244
    %v263 = vunpack.c.l.b16 %v220
    %v264 = vunpack.c.l.b16 %v221
    %v265 = vunpack.c.l.b16 %v222
    %v266 = vunpack.c.l.b16 %v223
    %v267 = vunpack.c.l.b16 %v224
    %v268 = vunpack.c.l.b16 %v225
    %v269 = vunpack.c.l.b16 %v226
    %v270 = vunpack.c.l.b16 %v227
    %v271 = vunpack.c.l.b16 %v228
    %v272 = vunpack.c.l.b16 %v229
    %v273 = vunpack.c.l.b16 %v230
    %v274 = vunpack.c.l.b16 %v231
    %v275 = vunpack.c.l.b16 %v232
    %v276 = vunpack.c.l.b16 %v233
    %v277 = vunpack.c.l.b16 %v234
    %v278 = vunpack.c.l.b16 %v235
    %v279 = vpack.c.b16 %v264, %v263
    %v280 = vpack.c.b16 %v266, %v265
    %v281 = vpack.c.b16 %v268, %v267
    %v282 = vpack.c.b16 %v270, %v269
    %v283 = vpack.c.b16 %v272, %v271
    %v284 = vpack.c.b16 %v274, %v273
    %v285 = vpack.c.b16 %v276, %v275
    %v286 = vpack.c.b16 %v278, %v277
    %295 = vmatprep.subr.bf16.mxu0 0
    %296 = vmatpush1.bf16.msra.mxu0 %v279
    %297 = vmatprep.subr.bf16.mxu0 0
    %298 = vmatpush1.bf16.msra.mxu0 %v280
    %299 = vmatprep.subr.bf16.mxu0 0
    %300 = vmatpush1.bf16.msra.mxu0 %v281
    %301 = vmatprep.subr.bf16.mxu0 0
    %302 = vmatpush1.bf16.msra.mxu0 %v282
    %303 = vmatprep.subr.bf16.mxu0 0
    %304 = vmatpush1.bf16.msra.mxu0 %v283
    %305 = vmatprep.subr.bf16.mxu0 0
    %306 = vmatpush1.bf16.msra.mxu0 %v284
    %307 = vmatprep.subr.bf16.mxu0 0
    %308 = vmatpush1.bf16.msra.mxu0 %v285
    %309 = vmatprep.subr.bf16.mxu0 0
    %310 = vmatpush1.bf16.msra.mxu0 %v286
    %311 = vmatprep.subr.bf16.mxu0 0
    %312 = vmatpush1.bf16.msra.mxu0 0
    %313 = vmatprep.subr.bf16.mxu0 0
    %314 = vmatpush1.bf16.msra.mxu0 0
    %315 = vmatprep.subr.bf16.mxu0 0
    %316 = vmatpush1.bf16.msra.mxu0 0
    %317 = vmatprep.subr.bf16.mxu0 0
    %318 = vmatpush1.bf16.msra.mxu0 0
    %319 = vmatprep.subr.bf16.mxu0 0
    %320 = vmatpush1.bf16.msra.mxu0 0
    %321 = vmatprep.subr.bf16.mxu0 0
    %322 = vmatpush1.bf16.msra.mxu0 0
    %323 = vmatprep.subr.bf16.mxu0 0
    %324 = vmatpush1.bf16.msra.mxu0 0
    %325 = vmatprep.subr.bf16.mxu0 0
    %326 = vmatpush1.bf16.msra.mxu0 0
    %327 = vmatprep.mubr.bf16.mxu0 0
    %328 = vmatmul.mubr.bf16.gmra.mrb[0].mxu0 %v236
    %v329 = vpop.f32.mrb[0].mxu0
    %v330 = vadd.f32 %v245, %v329
    %v331 = vpop.f32.mrb[0].mxu0
    %v332 = vpop.f32.mrb[0].mxu0
    %v333 = vadd.f32 %v245, %v332
    %v334 = vpop.f32.mrb[0].mxu0
    %335 = vmatprep.mubr.bf16.mxu0 0
    %336 = vmatmul.mubr.bf16.gmra.mrb[0].mxu0 %v237
    %v337 = vpop.f32.mrb[0].mxu0
    %v338 = vadd.f32 %v245, %v337
    %v339 = vpop.f32.mrb[0].mxu0
    %v340 = vpop.f32.mrb[0].mxu0
    %v341 = vadd.f32 %v245, %v340
    %v342 = vpop.f32.mrb[0].mxu0
    %343 = vmatprep.mubr.bf16.mxu0 0
    %344 = vmatmul.mubr.bf16.gmra.mrb[0].mxu0 %v238
    %v345 = vpop.f32.mrb[0].mxu0
    %v346 = vadd.f32 %v245, %v345
    %v347 = vpop.f32.mrb[0].mxu0
    %v348 = vpop.f32.mrb[0].mxu0
    %v349 = vadd.f32 %v245, %v348
    %v350 = vpop.f32.mrb[0].mxu0
    %351 = vmatprep.mubr.bf16.mxu0 0
    %352 = vmatmul.mubr.bf16.gmra.mrb[0].mxu0 %v239
    %v353 = vpop.f32.mrb[0].mxu0
    %v354 = vadd.f32 %v245, %v353
    %v355 = vpop.f32.mrb[0].mxu0
    %v356 = vpop.f32.mrb[0].mxu0
    %v357 = vadd.f32 %v245, %v356
    %v358 = vpop.f32.mrb[0].mxu0
    %359 = vdwg.mxu0
    %v360 = vmax.f32 %v330, 0.0
    %v361 = vmax.f32 %v333, 0.0
    %v362 = vmax.f32 %v338, 0.0
    %v363 = vmax.f32 %v341, 0.0
    %v364 = vmax.f32 %v346, 0.0
    %v365 = vmax.f32 %v349, 0.0
    %v366 = vmax.f32 %v354, 0.0
    %v367 = vmax.f32 %v357, 0.0
    %v368 = vld [vmem:[#allocation7] sm:$0xf]
    %v369 = vld [vmem:[#allocation7 + $0x4] sm:$0xf]
    %v370 = vld [vmem:[#allocation7 + $0x8] sm:$0xf]
    %v371 = vld [vmem:[#allocation7 + $0xc] sm:$0xf]
    %v372 = vld [vmem:[#allocation7 + $0x10] sm:$0xf]
    %v373 = vld [vmem:[#allocation7 + $0x14] sm:$0xf]
    %v374 = vld [vmem:[#allocation7 + $0x18] sm:$0xf]
    %v375 = vld [vmem:[#allocation7 + $0x1c] sm:$0xf]
    %v376 = vld [vmem:[#allocation7 + $0x20] sm:$0xf]
    %v377 = vld [vmem:[#allocation7 + $0x24] sm:$0xf]
    %v378 = vld [vmem:[#allocation7 + $0x28] sm:$0xf]
    %v379 = vld [vmem:[#allocation7 + $0x2c] sm:$0xf]
    %v380 = vld [vmem:[#allocation7 + $0x30] sm:$0xf]
    %v381 = vld [vmem:[#allocation7 + $0x34] sm:$0xf]
    %v382 = vld [vmem:[#allocation7 + $0x38] sm:$0xf]
    %v383 = vld [vmem:[#allocation7 + $0x3c] sm:$0xf]
    %v384 = vpack.c.bf16 %v361, %v360
    %v385 = vpack.c.bf16 %v363, %v362
    %v386 = vpack.c.bf16 %v365, %v364
    %v387 = vpack.c.bf16 %v367, %v366
    %v388 = vld [vmem:[%s5] sm:$0x1]
    %v390 = vlaneseq
    %v391 = vshrl.u32 %v390, 7
    %v392 = vsub.s32 0, %v391
    %v393 = vrot.slane %v388, %v392
    %v411 = vunpack.c.l.b16 %v368
    %v412 = vunpack.c.l.b16 %v369
    %v413 = vunpack.c.l.b16 %v370
    %v414 = vunpack.c.l.b16 %v371
    %v415 = vunpack.c.l.b16 %v372
    %v416 = vunpack.c.l.b16 %v373
    %v417 = vunpack.c.l.b16 %v374
    %v418 = vunpack.c.l.b16 %v375
    %v419 = vunpack.c.l.b16 %v376
    %v420 = vunpack.c.l.b16 %v377
    %v421 = vunpack.c.l.b16 %v378
    %v422 = vunpack.c.l.b16 %v379
    %v423 = vunpack.c.l.b16 %v380
    %v424 = vunpack.c.l.b16 %v381
    %v425 = vunpack.c.l.b16 %v382
    %v426 = vunpack.c.l.b16 %v383
    %v427 = vpack.c.b16 %v412, %v411
    %v428 = vpack.c.b16 %v414, %v413
    %v429 = vpack.c.b16 %v416, %v415
    %v430 = vpack.c.b16 %v418, %v417
    %v431 = vpack.c.b16 %v420, %v419
    %v432 = vpack.c.b16 %v422, %v421
    %v433 = vpack.c.b16 %v424, %v423
    %v434 = vpack.c.b16 %v426, %v425
    %443 = vmatprep.subr.bf16.mxu0 0
    %444 = vmatpush1.bf16.msra.mxu0 %v427
    %445 = vmatprep.subr.bf16.mxu0 0
    %446 = vmatpush1.bf16.msra.mxu0 %v428
    %447 = vmatprep.subr.bf16.mxu0 0
    %448 = vmatpush1.bf16.msra.mxu0 %v429
    %449 = vmatprep.subr.bf16.mxu0 0
    %450 = vmatpush1.bf16.msra.mxu0 %v430
    %451 = vmatprep.subr.bf16.mxu0 0
    %452 = vmatpush1.bf16.msra.mxu0 %v431
    %453 = vmatprep.subr.bf16.mxu0 0
    %454 = vmatpush1.bf16.msra.mxu0 %v432
    %455 = vmatprep.subr.bf16.mxu0 0
    %456 = vmatpush1.bf16.msra.mxu0 %v433
    %457 = vmatprep.subr.bf16.mxu0 0
    %458 = vmatpush1.bf16.msra.mxu0 %v434
    %459 = vmatprep.subr.bf16.mxu0 0
    %460 = vmatpush1.bf16.msra.mxu0 0
    %461 = vmatprep.subr.bf16.mxu0 0
    %462 = vmatpush1.bf16.msra.mxu0 0
    %463 = vmatprep.subr.bf16.mxu0 0
    %464 = vmatpush1.bf16.msra.mxu0 0
    %465 = vmatprep.subr.bf16.mxu0 0
    %466 = vmatpush1.bf16.msra.mxu0 0
    %467 = vmatprep.subr.bf16.mxu0 0
    %468 = vmatpush1.bf16.msra.mxu0 0
    %469 = vmatprep.subr.bf16.mxu0 0
    %470 = vmatpush1.bf16.msra.mxu0 0
    %471 = vmatprep.subr.bf16.mxu0 0
    %472 = vmatpush1.bf16.msra.mxu0 0
    %473 = vmatprep.subr.bf16.mxu0 0
    %474 = vmatpush1.bf16.msra.mxu0 0
    %475 = vmatprep.mubr.bf16.mxu0 0
    %476 = vmatmul.mubr.bf16.gmra.mrb[0].mxu0 %v384
    %v477 = vpop.f32.mrb[0].mxu0
    %v478 = vadd.f32 %v393, %v477
    %v479 = vpop.f32.mrb[0].mxu0
    %v480 = vpop.f32.mrb[0].mxu0
    %v481 = vadd.f32 %v393, %v480
    %v482 = vpop.f32.mrb[0].mxu0
    %483 = vmatprep.mubr.bf16.mxu0 0
    %484 = vmatmul.mubr.bf16.gmra.mrb[0].mxu0 %v385
    %v485 = vpop.f32.mrb[0].mxu0
    %v486 = vadd.f32 %v393, %v485
    %v487 = vpop.f32.mrb[0].mxu0
    %v488 = vpop.f32.mrb[0].mxu0
    %v489 = vadd.f32 %v393, %v488
    %v490 = vpop.f32.mrb[0].mxu0
    %491 = vmatprep.mubr.bf16.mxu0 0
    %492 = vmatmul.mubr.bf16.gmra.mrb[0].mxu0 %v386
    %v493 = vpop.f32.mrb[0].mxu0
    %v494 = vadd.f32 %v393, %v493
    %v495 = vpop.f32.mrb[0].mxu0
    %v496 = vpop.f32.mrb[0].mxu0
    %v497 = vadd.f32 %v393, %v496
    %v498 = vpop.f32.mrb[0].mxu0
    %499 = vmatprep.mubr.bf16.mxu0 0
    %500 = vmatmul.mubr.bf16.gmra.mrb[0].mxu0 %v387
    %v501 = vpop.f32.mrb[0].mxu0
    %v502 = vadd.f32 %v393, %v501
    %v503 = vpop.f32.mrb[0].mxu0
    %v504 = vpop.f32.mrb[0].mxu0
    %v505 = vadd.f32 %v393, %v504
    %v506 = vpop.f32.mrb[0].mxu0
    %507 = vdwg.mxu0
    %v508 = vadd.f32 %v478, 0.0
    %v509 = vadd.f32 %v481, 0.0
    %v510 = vadd.f32 %v486, 0.0
    %v511 = vadd.f32 %v489, 0.0
    %v512 = vadd.f32 %v494, 0.0
    %v513 = vadd.f32 %v497, 0.0
    %v514 = vadd.f32 %v502, 0.0
    %v515 = vadd.f32 %v505, 0.0
    %v516 = vpack.c.bf16 %v481, %v478
    %v517 = vpack.c.bf16 %v489, %v486
    %v518 = vpack.c.bf16 %v497, %v494
    %v519 = vpack.c.bf16 %v505, %v502
    %520 = vmatprep.subr.bf16.mxu0 0
    %521 = vmatpush1.bf16.msra.mxu0 %v516
    %522 = vmatprep.subr.bf16.mxu0 0
    %523 = vmatpush1.bf16.msra.mxu0 %v517
    %524 = vmatprep.subr.bf16.mxu0 0
    %525 = vmatpush1.bf16.msra.mxu0 %v518
    %526 = vmatprep.subr.bf16.mxu0 0
    %527 = vmatpush1.bf16.msra.mxu0 %v519
    %528 = vmatprep.subr.bf16.mxu0 0
    %529 = vmatpush1.bf16.msra.mxu0 0
    %530 = vmatprep.subr.bf16.mxu0 0
    %531 = vmatpush1.bf16.msra.mxu0 0
    %532 = vmatprep.subr.bf16.mxu0 0
    %533 = vmatpush1.bf16.msra.mxu0 0
    %534 = vmatprep.subr.bf16.mxu0 0
    %535 = vmatpush1.bf16.msra.mxu0 0
    %536 = vmatprep.subr.bf16.mxu0 0
    %537 = vmatpush1.bf16.msra.mxu0 0
    %538 = vmatprep.subr.bf16.mxu0 0
    %539 = vmatpush1.bf16.msra.mxu0 0
    %540 = vmatprep.subr.bf16.mxu0 0
    %541 = vmatpush1.bf16.msra.mxu0 0
    %542 = vmatprep.subr.bf16.mxu0 0
    %543 = vmatpush1.bf16.msra.mxu0 0
    %544 = vmatprep.subr.bf16.mxu0 0
    %545 = vmatpush1.bf16.msra.mxu0 0
    %546 = vmatprep.subr.bf16.mxu0 0
    %547 = vmatpush1.bf16.msra.mxu0 0
    %548 = vmatprep.subr.bf16.mxu0 0
    %549 = vmatpush1.bf16.msra.mxu0 0
    %550 = vmatprep.subr.bf16.mxu0 0
    %551 = vmatpush1.bf16.msra.mxu0 0
    %552 = vmatprep.mubr.bf16.mxu0 0
    %553 = vmatmul.mubr.bf16.gmra.mrb[0].mxu0 %v144
    %v554 = vpop.f32.mrb[0].mxu0
    %v555 = vadd.f32 0.0, %v554
    %v556 = vpop.f32.mrb[0].mxu0
    %v557 = vpop.f32.mrb[0].mxu0
    %v558 = vadd.f32 0.0, %v557
    %v559 = vpop.f32.mrb[0].mxu0
    %560 = vmatprep.mubr.bf16.mxu0 0
    %561 = vmatmul.mubr.bf16.gmra.mrb[0].mxu0 %v147
    %v562 = vpop.f32.mrb[0].mxu0
    %v563 = vadd.f32 0.0, %v562
    %v564 = vpop.f32.mrb[0].mxu0
    %v565 = vpop.f32.mrb[0].mxu0
    %v566 = vadd.f32 0.0, %v565
    %v567 = vpop.f32.mrb[0].mxu0
    %568 = vmatprep.mubr.bf16.mxu0 0
    %569 = vmatmul.mubr.bf16.gmra.mrb[0].mxu0 %v150
    %v570 = vpop.f32.mrb[0].mxu0
    %v571 = vadd.f32 0.0, %v570
    %v572 = vpop.f32.mrb[0].mxu0
    %v573 = vpop.f32.mrb[0].mxu0
    %v574 = vadd.f32 0.0, %v573
    %v575 = vpop.f32.mrb[0].mxu0
    %576 = vmatprep.mubr.bf16.mxu0 0
    %577 = vmatmul.mubr.bf16.gmra.mrb[0].mxu0 %v153
    %v578 = vpop.f32.mrb[0].mxu0
    %v579 = vadd.f32 0.0, %v578
    %v580 = vpop.f32.mrb[0].mxu0
    %v581 = vpop.f32.mrb[0].mxu0
    %v582 = vadd.f32 0.0, %v581
    %v583 = vpop.f32.mrb[0].mxu0
    %584 = vdwg.mxu0
    %s585 = scalar_lea.vmem [#allocation6], 64
    %v586 = vld [vmem:[%s585] sm:$0xf]
    %v587 = vld [vmem:[%s585 + $0x4] sm:$0xf]
    %v588 = vld [vmem:[%s585 + $0x8] sm:$0xf]
    %v589 = vld [vmem:[%s585 + $0xc] sm:$0xf]
    %v590 = vld [vmem:[%s585 + $0x10] sm:$0xf]
    %v591 = vld [vmem:[%s585 + $0x14] sm:$0xf]
    %v592 = vld [vmem:[%s585 + $0x18] sm:$0xf]
    %v593 = vld [vmem:[%s585 + $0x1c] sm:$0xf]
    %v594 = vld [vmem:[%s585 + $0x20] sm:$0xf]
    %v595 = vld [vmem:[%s585 + $0x24] sm:$0xf]
    %v596 = vld [vmem:[%s585 + $0x28] sm:$0xf]
    %v597 = vld [vmem:[%s585 + $0x2c] sm:$0xf]
    %v598 = vld [vmem:[%s585 + $0x30] sm:$0xf]
    %v599 = vld [vmem:[%s585 + $0x34] sm:$0xf]
    %v600 = vld [vmem:[%s585 + $0x38] sm:$0xf]
    %v601 = vld [vmem:[%s585 + $0x3c] sm:$0xf]
    %v602 = vpack.c.bf16 %v558, %v555
    %v603 = vpack.c.bf16 %v566, %v563
    %v604 = vpack.c.bf16 %v574, %v571
    %v605 = vpack.c.bf16 %v582, %v579
    %s606 = scalar_lea.vmem %s3, 1
    %v607 = vld [vmem:[%s606] sm:$0x1]
    %v609 = vlaneseq
    %v610 = vshrl.u32 %v609, 7
    %v611 = vsub.s32 0, %v610
    %v612 = vrot.slane %v607, %v611
    %v630 = vunpack.c.l.b16 %v586
    %v631 = vunpack.c.l.b16 %v587
    %v632 = vunpack.c.l.b16 %v588
    %v633 = vunpack.c.l.b16 %v589
    %v634 = vunpack.c.l.b16 %v590
    %v635 = vunpack.c.l.b16 %v591
    %v636 = vunpack.c.l.b16 %v592
    %v637 = vunpack.c.l.b16 %v593
    %v638 = vunpack.c.l.b16 %v594
    %v639 = vunpack.c.l.b16 %v595
    %v640 = vunpack.c.l.b16 %v596
    %v641 = vunpack.c.l.b16 %v597
    %v642 = vunpack.c.l.b16 %v598
    %v643 = vunpack.c.l.b16 %v599
    %v644 = vunpack.c.l.b16 %v600
    %v645 = vunpack.c.l.b16 %v601
    %v646 = vpack.c.b16 %v631, %v630
    %v647 = vpack.c.b16 %v633, %v632
    %v648 = vpack.c.b16 %v635, %v634
    %v649 = vpack.c.b16 %v637, %v636
    %v650 = vpack.c.b16 %v639, %v638
    %v651 = vpack.c.b16 %v641, %v640
    %v652 = vpack.c.b16 %v643, %v642
    %v653 = vpack.c.b16 %v645, %v644
    %662 = vmatprep.subr.bf16.mxu0 0
    %663 = vmatpush1.bf16.msra.mxu0 %v646
    %664 = vmatprep.subr.bf16.mxu0 0
    %665 = vmatpush1.bf16.msra.mxu0 %v647
    %666 = vmatprep.subr.bf16.mxu0 0
    %667 = vmatpush1.bf16.msra.mxu0 %v648
    %668 = vmatprep.subr.bf16.mxu0 0
    %669 = vmatpush1.bf16.msra.mxu0 %v649
    %670 = vmatprep.subr.bf16.mxu0 0
    %671 = vmatpush1.bf16.msra.mxu0 %v650
    %672 = vmatprep.subr.bf16.mxu0 0
    %673 = vmatpush1.bf16.msra.mxu0 %v651
    %674 = vmatprep.subr.bf16.mxu0 0
    %675 = vmatpush1.bf16.msra.mxu0 %v652
    %676 = vmatprep.subr.bf16.mxu0 0
    %677 = vmatpush1.bf16.msra.mxu0 %v653
    %678 = vmatprep.subr.bf16.mxu0 0
    %679 = vmatpush1.bf16.msra.mxu0 0
    %680 = vmatprep.subr.bf16.mxu0 0
    %681 = vmatpush1.bf16.msra.mxu0 0
    %682 = vmatprep.subr.bf16.mxu0 0
    %683 = vmatpush1.bf16.msra.mxu0 0
    %684 = vmatprep.subr.bf16.mxu0 0
    %685 = vmatpush1.bf16.msra.mxu0 0
    %686 = vmatprep.subr.bf16.mxu0 0
    %687 = vmatpush1.bf16.msra.mxu0 0
    %688 = vmatprep.subr.bf16.mxu0 0
    %689 = vmatpush1.bf16.msra.mxu0 0
    %690 = vmatprep.subr.bf16.mxu0 0
    %691 = vmatpush1.bf16.msra.mxu0 0
    %692 = vmatprep.subr.bf16.mxu0 0
    %693 = vmatpush1.bf16.msra.mxu0 0
    %694 = vmatprep.mubr.bf16.mxu0 0
    %695 = vmatmul.mubr.bf16.gmra.mrb[0].mxu0 %v602
    %v696 = vpop.f32.mrb[0].mxu0
    %v697 = vadd.f32 %v612, %v696
    %v698 = vpop.f32.mrb[0].mxu0
    %v699 = vpop.f32.mrb[0].mxu0
    %v700 = vadd.f32 %v612, %v699
    %v701 = vpop.f32.mrb[0].mxu0
    %702 = vmatprep.mubr.bf16.mxu0 0
    %703 = vmatmul.mubr.bf16.gmra.mrb[0].mxu0 %v603
    %v704 = vpop.f32.mrb[0].mxu0
    %v705 = vadd.f32 %v612, %v704
    %v706 = vpop.f32.mrb[0].mxu0
    %v707 = vpop.f32.mrb[0].mxu0
    %v708 = vadd.f32 %v612, %v707
    %v709 = vpop.f32.mrb[0].mxu0
    %710 = vmatprep.mubr.bf16.mxu0 0
    %711 = vmatmul.mubr.bf16.gmra.mrb[0].mxu0 %v604
    %v712 = vpop.f32.mrb[0].mxu0
    %v713 = vadd.f32 %v612, %v712
    %v714 = vpop.f32.mrb[0].mxu0
    %v715 = vpop.f32.mrb[0].mxu0
    %v716 = vadd.f32 %v612, %v715
    %v717 = vpop.f32.mrb[0].mxu0
    %718 = vmatprep.mubr.bf16.mxu0 0
    %719 = vmatmul.mubr.bf16.gmra.mrb[0].mxu0 %v605
    %v720 = vpop.f32.mrb[0].mxu0
    %v721 = vadd.f32 %v612, %v720
    %v722 = vpop.f32.mrb[0].mxu0
    %v723 = vpop.f32.mrb[0].mxu0
    %v724 = vadd.f32 %v612, %v723
    %v725 = vpop.f32.mrb[0].mxu0
    %726 = vdwg.mxu0
    %v727 = vmax.f32 %v697, 0.0
    %v728 = vmax.f32 %v700, 0.0
    %v729 = vmax.f32 %v705, 0.0
    %v730 = vmax.f32 %v708, 0.0
    %v731 = vmax.f32 %v713, 0.0
    %v732 = vmax.f32 %v716, 0.0
    %v733 = vmax.f32 %v721, 0.0
    %v734 = vmax.f32 %v724, 0.0
    %s735 = scalar_lea.vmem [#allocation7], 64
    %v736 = vld [vmem:[%s735] sm:$0xf]
    %v737 = vld [vmem:[%s735 + $0x4] sm:$0xf]
    %v738 = vld [vmem:[%s735 + $0x8] sm:$0xf]
    %v739 = vld [vmem:[%s735 + $0xc] sm:$0xf]
    %v740 = vld [vmem:[%s735 + $0x10] sm:$0xf]
    %v741 = vld [vmem:[%s735 + $0x14] sm:$0xf]
    %v742 = vld [vmem:[%s735 + $0x18] sm:$0xf]
    %v743 = vld [vmem:[%s735 + $0x1c] sm:$0xf]
    %v744 = vld [vmem:[%s735 + $0x20] sm:$0xf]
    %v745 = vld [vmem:[%s735 + $0x24] sm:$0xf]
    %v746 = vld [vmem:[%s735 + $0x28] sm:$0xf]
    %v747 = vld [vmem:[%s735 + $0x2c] sm:$0xf]
    %v748 = vld [vmem:[%s735 + $0x30] sm:$0xf]
    %v749 = vld [vmem:[%s735 + $0x34] sm:$0xf]
    %v750 = vld [vmem:[%s735 + $0x38] sm:$0xf]
    %v751 = vld [vmem:[%s735 + $0x3c] sm:$0xf]
    %v752 = vpack.c.bf16 %v728, %v727
    %v753 = vpack.c.bf16 %v730, %v729
    %v754 = vpack.c.bf16 %v732, %v731
    %v755 = vpack.c.bf16 %v734, %v733
    %s756 = scalar_lea.vmem %s5, 1
    %v757 = vld [vmem:[%s756] sm:$0x1]
    %v759 = vlaneseq
    %v760 = vshrl.u32 %v759, 7
    %v761 = vsub.s32 0, %v760
    %v762 = vrot.slane %v757, %v761
    %v780 = vunpack.c.l.b16 %v736
    %v781 = vunpack.c.l.b16 %v737
    %v782 = vunpack.c.l.b16 %v738
    %v783 = vunpack.c.l.b16 %v739
    %v784 = vunpack.c.l.b16 %v740
    %v785 = vunpack.c.l.b16 %v741
    %v786 = vunpack.c.l.b16 %v742
    %v787 = vunpack.c.l.b16 %v743
    %v788 = vunpack.c.l.b16 %v744
    %v789 = vunpack.c.l.b16 %v745
    %v790 = vunpack.c.l.b16 %v746
    %v791 = vunpack.c.l.b16 %v747
    %v792 = vunpack.c.l.b16 %v748
    %v793 = vunpack.c.l.b16 %v749
    %v794 = vunpack.c.l.b16 %v750
    %v795 = vunpack.c.l.b16 %v751
    %v796 = vpack.c.b16 %v781, %v780
    %v797 = vpack.c.b16 %v783, %v782
    %v798 = vpack.c.b16 %v785, %v784
    %v799 = vpack.c.b16 %v787, %v786
    %v800 = vpack.c.b16 %v789, %v788
    %v801 = vpack.c.b16 %v791, %v790
    %v802 = vpack.c.b16 %v793, %v792
    %v803 = vpack.c.b16 %v795, %v794
    %812 = vmatprep.subr.bf16.mxu0 0
    %813 = vmatpush1.bf16.msra.mxu0 %v796
    %814 = vmatprep.subr.bf16.mxu0 0
    %815 = vmatpush1.bf16.msra.mxu0 %v797
    %816 = vmatprep.subr.bf16.mxu0 0
    %817 = vmatpush1.bf16.msra.mxu0 %v798
    %818 = vmatprep.subr.bf16.mxu0 0
    %819 = vmatpush1.bf16.msra.mxu0 %v799
    %820 = vmatprep.subr.bf16.mxu0 0
    %821 = vmatpush1.bf16.msra.mxu0 %v800
    %822 = vmatprep.subr.bf16.mxu0 0
    %823 = vmatpush1.bf16.msra.mxu0 %v801
    %824 = vmatprep.subr.bf16.mxu0 0
    %825 = vmatpush1.bf16.msra.mxu0 %v802
    %826 = vmatprep.subr.bf16.mxu0 0
    %827 = vmatpush1.bf16.msra.mxu0 %v803
    %828 = vmatprep.subr.bf16.mxu0 0
    %829 = vmatpush1.bf16.msra.mxu0 0
    %830 = vmatprep.subr.bf16.mxu0 0
    %831 = vmatpush1.bf16.msra.mxu0 0
    %832 = vmatprep.subr.bf16.mxu0 0
    %833 = vmatpush1.bf16.msra.mxu0 0
    %834 = vmatprep.subr.bf16.mxu0 0
    %835 = vmatpush1.bf16.msra.mxu0 0
    %836 = vmatprep.subr.bf16.mxu0 0
    %837 = vmatpush1.bf16.msra.mxu0 0
    %838 = vmatprep.subr.bf16.mxu0 0
    %839 = vmatpush1.bf16.msra.mxu0 0
    %840 = vmatprep.subr.bf16.mxu0 0
    %841 = vmatpush1.bf16.msra.mxu0 0
    %842 = vmatprep.subr.bf16.mxu0 0
    %843 = vmatpush1.bf16.msra.mxu0 0
    %844 = vmatprep.mubr.bf16.mxu0 0
    %845 = vmatmul.mubr.bf16.gmra.mrb[0].mxu0 %v752
    %v846 = vpop.f32.mrb[0].mxu0
    %v847 = vadd.f32 %v762, %v846
    %v848 = vpop.f32.mrb[0].mxu0
    %v849 = vpop.f32.mrb[0].mxu0
    %v850 = vadd.f32 %v762, %v849
    %v851 = vpop.f32.mrb[0].mxu0
    %852 = vmatprep.mubr.bf16.mxu0 0
    %853 = vmatmul.mubr.bf16.gmra.mrb[0].mxu0 %v753
    %v854 = vpop.f32.mrb[0].mxu0
    %v855 = vadd.f32 %v762, %v854
    %v856 = vpop.f32.mrb[0].mxu0
    %v857 = vpop.f32.mrb[0].mxu0
    %v858 = vadd.f32 %v762, %v857
    %v859 = vpop.f32.mrb[0].mxu0
    %860 = vmatprep.mubr.bf16.mxu0 0
    %861 = vmatmul.mubr.bf16.gmra.mrb[0].mxu0 %v754
    %v862 = vpop.f32.mrb[0].mxu0
    %v863 = vadd.f32 %v762, %v862
    %v864 = vpop.f32.mrb[0].mxu0
    %v865 = vpop.f32.mrb[0].mxu0
    %v866 = vadd.f32 %v762, %v865
    %v867 = vpop.f32.mrb[0].mxu0
    %868 = vmatprep.mubr.bf16.mxu0 0
    %869 = vmatmul.mubr.bf16.gmra.mrb[0].mxu0 %v755
    %v870 = vpop.f32.mrb[0].mxu0
    %v871 = vadd.f32 %v762, %v870
    %v872 = vpop.f32.mrb[0].mxu0
    %v873 = vpop.f32.mrb[0].mxu0
    %v874 = vadd.f32 %v762, %v873
    %v875 = vpop.f32.mrb[0].mxu0
    %876 = vdwg.mxu0
    %v877 = vadd.f32 %v508, %v847
    %v878 = vadd.f32 %v509, %v850
    %v879 = vadd.f32 %v510, %v855
    %v880 = vadd.f32 %v511, %v858
    %v881 = vadd.f32 %v512, %v863
    %v882 = vadd.f32 %v513, %v866
    %v883 = vadd.f32 %v514, %v871
    %v884 = vadd.f32 %v515, %v874
    %v885 = vpack.c.bf16 %v850, %v847
    %v886 = vpack.c.bf16 %v858, %v855
    %v887 = vpack.c.bf16 %v866, %v863
    %v888 = vpack.c.bf16 %v874, %v871
    %889 = vmatprep.subr.bf16.mxu0 0
    %890 = vmatpush1.bf16.msra.mxu0 %v885
    %891 = vmatprep.subr.bf16.mxu0 0
    %892 = vmatpush1.bf16.msra.mxu0 %v886
    %893 = vmatprep.subr.bf16.mxu0 0
    %894 = vmatpush1.bf16.msra.mxu0 %v887
    %895 = vmatprep.subr.bf16.mxu0 0
    %896 = vmatpush1.bf16.msra.mxu0 %v888
    %897 = vmatprep.subr.bf16.mxu0 0
    %898 = vmatpush1.bf16.msra.mxu0 0
    %899 = vmatprep.subr.bf16.mxu0 0
    %900 = vmatpush1.bf16.msra.mxu0 0
    %901 = vmatprep.subr.bf16.mxu0 0
    %902 = vmatpush1.bf16.msra.mxu0 0
    %903 = vmatprep.subr.bf16.mxu0 0
    %904 = vmatpush1.bf16.msra.mxu0 0
    %905 = vmatprep.subr.bf16.mxu0 0
    %906 = vmatpush1.bf16.msra.mxu0 0
    %907 = vmatprep.subr.bf16.mxu0 0
    %908 = vmatpush1.bf16.msra.mxu0 0
    %909 = vmatprep.subr.bf16.mxu0 0
    %910 = vmatpush1.bf16.msra.mxu0 0
    %911 = vmatprep.subr.bf16.mxu0 0
    %912 = vmatpush1.bf16.msra.mxu0 0
    %913 = vmatprep.subr.bf16.mxu0 0
    %914 = vmatpush1.bf16.msra.mxu0 0
    %915 = vmatprep.subr.bf16.mxu0 0
    %916 = vmatpush1.bf16.msra.mxu0 0
    %917 = vmatprep.subr.bf16.mxu0 0
    %918 = vmatpush1.bf16.msra.mxu0 0
    %919 = vmatprep.subr.bf16.mxu0 0
    %920 = vmatpush1.bf16.msra.mxu0 0
    %921 = vmatprep.mubr.bf16.mxu0 0
    %922 = vmatmul.mubr.bf16.gmra.mrb[0].mxu0 %v144
    %v923 = vpop.f32.mrb[0].mxu0
    %v924 = vadd.f32 0.0, %v923
    %v925 = vpop.f32.mrb[0].mxu0
    %v926 = vpop.f32.mrb[0].mxu0
    %v927 = vadd.f32 0.0, %v926
    %v928 = vpop.f32.mrb[0].mxu0
    %929 = vmatprep.mubr.bf16.mxu0 0
    %930 = vmatmul.mubr.bf16.gmra.mrb[0].mxu0 %v147
    %v931 = vpop.f32.mrb[0].mxu0
    %v932 = vadd.f32 0.0, %v931
    %v933 = vpop.f32.mrb[0].mxu0
    %v934 = vpop.f32.mrb[0].mxu0
    %v935 = vadd.f32 0.0, %v934
    %v936 = vpop.f32.mrb[0].mxu0
    %937 = vmatprep.mubr.bf16.mxu0 0
    %938 = vmatmul.mubr.bf16.gmra.mrb[0].mxu0 %v150
    %v939 = vpop.f32.mrb[0].mxu0
    %v940 = vadd.f32 0.0, %v939
    %v941 = vpop.f32.mrb[0].mxu0
    %v942 = vpop.f32.mrb[0].mxu0
    %v943 = vadd.f32 0.0, %v942
    %v944 = vpop.f32.mrb[0].mxu0
    %945 = vmatprep.mubr.bf16.mxu0 0
    %946 = vmatmul.mubr.bf16.gmra.mrb[0].mxu0 %v153
    %v947 = vpop.f32.mrb[0].mxu0
    %v948 = vadd.f32 0.0, %v947
    %v949 = vpop.f32.mrb[0].mxu0
    %v950 = vpop.f32.mrb[0].mxu0
    %v951 = vadd.f32 0.0, %v950
    %v952 = vpop.f32.mrb[0].mxu0
    %953 = vdwg.mxu0
    %s954 = scalar_lea.vmem [#allocation6], 128
    %v955 = vld [vmem:[%s954] sm:$0xf]
    %v956 = vld [vmem:[%s954 + $0x4] sm:$0xf]
    %v957 = vld [vmem:[%s954 + $0x8] sm:$0xf]
    %v958 = vld [vmem:[%s954 + $0xc] sm:$0xf]
    %v959 = vld [vmem:[%s954 + $0x10] sm:$0xf]
    %v960 = vld [vmem:[%s954 + $0x14] sm:$0xf]
    %v961 = vld [vmem:[%s954 + $0x18] sm:$0xf]
    %v962 = vld [vmem:[%s954 + $0x1c] sm:$0xf]
    %v963 = vld [vmem:[%s954 + $0x20] sm:$0xf]
    %v964 = vld [vmem:[%s954 + $0x24] sm:$0xf]
    %v965 = vld [vmem:[%s954 + $0x28] sm:$0xf]
    %v966 = vld [vmem:[%s954 + $0x2c] sm:$0xf]
    %v967 = vld [vmem:[%s954 + $0x30] sm:$0xf]
    %v968 = vld [vmem:[%s954 + $0x34] sm:$0xf]
    %v969 = vld [vmem:[%s954 + $0x38] sm:$0xf]
    %v970 = vld [vmem:[%s954 + $0x3c] sm:$0xf]
    %v971 = vpack.c.bf16 %v927, %v924
    %v972 = vpack.c.bf16 %v935, %v932
    %v973 = vpack.c.bf16 %v943, %v940
    %v974 = vpack.c.bf16 %v951, %v948
    %s975 = scalar_lea.vmem %s3, 2
    %v976 = vld [vmem:[%s975] sm:$0x1]
    %v978 = vlaneseq
    %v979 = vshrl.u32 %v978, 7
    %v980 = vsub.s32 0, %v979
    %v981 = vrot.slane %v976, %v980
    %v999 = vunpack.c.l.b16 %v955
    %v1000 = vunpack.c.l.b16 %v956
    %v1001 = vunpack.c.l.b16 %v957
    %v1002 = vunpack.c.l.b16 %v958
    %v1003 = vunpack.c.l.b16 %v959
    %v1004 = vunpack.c.l.b16 %v960
    %v1005 = vunpack.c.l.b16 %v961
    %v1006 = vunpack.c.l.b16 %v962
    %v1007 = vunpack.c.l.b16 %v963
    %v1008 = vunpack.c.l.b16 %v964
    %v1009 = vunpack.c.l.b16 %v965
    %v1010 = vunpack.c.l.b16 %v966
    %v1011 = vunpack.c.l.b16 %v967
    %v1012 = vunpack.c.l.b16 %v968
    %v1013 = vunpack.c.l.b16 %v969
    %v1014 = vunpack.c.l.b16 %v970
    %v1015 = vpack.c.b16 %v1000, %v999
    %v1016 = vpack.c.b16 %v1002, %v1001
    %v1017 = vpack.c.b16 %v1004, %v1003
    %v1018 = vpack.c.b16 %v1006, %v1005
    %v1019 = vpack.c.b16 %v1008, %v1007
    %v1020 = vpack.c.b16 %v1010, %v1009
    %v1021 = vpack.c.b16 %v1012, %v1011
    %v1022 = vpack.c.b16 %v1014, %v1013
    %1031 = vmatprep.subr.bf16.mxu0 0
    %1032 = vmatpush1.bf16.msra.mxu0 %v1015
    %1033 = vmatprep.subr.bf16.mxu0 0
    %1034 = vmatpush1.bf16.msra.mxu0 %v1016
    %1035 = vmatprep.subr.bf16.mxu0 0
    %1036 = vmatpush1.bf16.msra.mxu0 %v1017
    %1037 = vmatprep.subr.bf16.mxu0 0
    %1038 = vmatpush1.bf16.msra.mxu0 %v1018
    %1039 = vmatprep.subr.bf16.mxu0 0
    %1040 = vmatpush1.bf16.msra.mxu0 %v1019
    %1041 = vmatprep.subr.bf16.mxu0 0
    %1042 = vmatpush1.bf16.msra.mxu0 %v1020
    %1043 = vmatprep.subr.bf16.mxu0 0
    %1044 = vmatpush1.bf16.msra.mxu0 %v1021
    %1045 = vmatprep.subr.bf16.mxu0 0
    %1046 = vmatpush1.bf16.msra.mxu0 %v1022
    %1047 = vmatprep.subr.bf16.mxu0 0
    %1048 = vmatpush1.bf16.msra.mxu0 0
    %1049 = vmatprep.subr.bf16.mxu0 0
    %1050 = vmatpush1.bf16.msra.mxu0 0
    %1051 = vmatprep.subr.bf16.mxu0 0
    %1052 = vmatpush1.bf16.msra.mxu0 0
    %1053 = vmatprep.subr.bf16.mxu0 0
    %1054 = vmatpush1.bf16.msra.mxu0 0
    %1055 = vmatprep.subr.bf16.mxu0 0
    %1056 = vmatpush1.bf16.msra.mxu0 0
    %1057 = vmatprep.subr.bf16.mxu0 0
    %1058 = vmatpush1.bf16.msra.mxu0 0
    %1059 = vmatprep.subr.bf16.mxu0 0
    %1060 = vmatpush1.bf16.msra.mxu0 0
    %1061 = vmatprep.subr.bf16.mxu0 0
    %1062 = vmatpush1.bf16.msra.mxu0 0
    %1063 = vmatprep.mubr.bf16.mxu0 0
    %1064 = vmatmul.mubr.bf16.gmra.mrb[0].mxu0 %v971
    %v1065 = vpop.f32.mrb[0].mxu0
    %v1066 = vadd.f32 %v981, %v1065
    %v1067 = vpop.f32.mrb[0].mxu0
    %v1068 = vpop.f32.mrb[0].mxu0
    %v1069 = vadd.f32 %v981, %v1068
    %v1070 = vpop.f32.mrb[0].mxu0
    %1071 = vmatprep.mubr.bf16.mxu0 0
    %1072 = vmatmul.mubr.bf16.gmra.mrb[0].mxu0 %v972
    %v1073 = vpop.f32.mrb[0].mxu0
    %v1074 = vadd.f32 %v981, %v1073
    %v1075 = vpop.f32.mrb[0].mxu0
    %v1076 = vpop.f32.mrb[0].mxu0
    %v1077 = vadd.f32 %v981, %v1076
    %v1078 = vpop.f32.mrb[0].mxu0
    %1079 = vmatprep.mubr.bf16.mxu0 0
    %1080 = vmatmul.mubr.bf16.gmra.mrb[0].mxu0 %v973
    %v1081 = vpop.f32.mrb[0].mxu0
    %v1082 = vadd.f32 %v981, %v1081
    %v1083 = vpop.f32.mrb[0].mxu0
    %v1084 = vpop.f32.mrb[0].mxu0
    %v1085 = vadd.f32 %v981, %v1084
    %v1086 = vpop.f32.mrb[0].mxu0
    %1087 = vmatprep.mubr.bf16.mxu0 0
    %1088 = vmatmul.mubr.bf16.gmra.mrb[0].mxu0 %v974
    %v1089 = vpop.f32.mrb[0].mxu0
    %v1090 = vadd.f32 %v981, %v1089
    %v1091 = vpop.f32.mrb[0].mxu0
    %v1092 = vpop.f32.mrb[0].mxu0
    %v1093 = vadd.f32 %v981, %v1092
    %v1094 = vpop.f32.mrb[0].mxu0
    %1095 = vdwg.mxu0
    %v1096 = vmax.f32 %v1066, 0.0
    %v1097 = vmax.f32 %v1069, 0.0
    %v1098 = vmax.f32 %v1074, 0.0
    %v1099 = vmax.f32 %v1077, 0.0
    %v1100 = vmax.f32 %v1082, 0.0
    %v1101 = vmax.f32 %v1085, 0.0
    %v1102 = vmax.f32 %v1090, 0.0
    %v1103 = vmax.f32 %v1093, 0.0
    %s1104 = scalar_lea.vmem [#allocation7], 128
    %v1105 = vld [vmem:[%s1104] sm:$0xf]
    %v1106 = vld [vmem:[%s1104 + $0x4] sm:$0xf]
    %v1107 = vld [vmem:[%s1104 + $0x8] sm:$0xf]
    %v1108 = vld [vmem:[%s1104 + $0xc] sm:$0xf]
    %v1109 = vld [vmem:[%s1104 + $0x10] sm:$0xf]
    %v1110 = vld [vmem:[%s1104 + $0x14] sm:$0xf]
    %v1111 = vld [vmem:[%s1104 + $0x18] sm:$0xf]
    %v1112 = vld [vmem:[%s1104 + $0x1c] sm:$0xf]
    %v1113 = vld [vmem:[%s1104 + $0x20] sm:$0xf]
    %v1114 = vld [vmem:[%s1104 + $0x24] sm:$0xf]
    %v1115 = vld [vmem:[%s1104 + $0x28] sm:$0xf]
    %v1116 = vld [vmem:[%s1104 + $0x2c] sm:$0xf]
    %v1117 = vld [vmem:[%s1104 + $0x30] sm:$0xf]
    %v1118 = vld [vmem:[%s1104 + $0x34] sm:$0xf]
    %v1119 = vld [vmem:[%s1104 + $0x38] sm:$0xf]
    %v1120 = vld [vmem:[%s1104 + $0x3c] sm:$0xf]
    %v1121 = vpack.c.bf16 %v1097, %v1096
    %v1122 = vpack.c.bf16 %v1099, %v1098
    %v1123 = vpack.c.bf16 %v1101, %v1100
    %v1124 = vpack.c.bf16 %v1103, %v1102
    %s1125 = scalar_lea.vmem %s5, 2
    %v1126 = vld [vmem:[%s1125] sm:$0x1]
    %v1128 = vlaneseq
    %v1129 = vshrl.u32 %v1128, 7
    %v1130 = vsub.s32 0, %v1129
    %v1131 = vrot.slane %v1126, %v1130
    %v1149 = vunpack.c.l.b16 %v1105
    %v1150 = vunpack.c.l.b16 %v1106
    %v1151 = vunpack.c.l.b16 %v1107
    %v1152 = vunpack.c.l.b16 %v1108
    %v1153 = vunpack.c.l.b16 %v1109
    %v1154 = vunpack.c.l.b16 %v1110
    %v1155 = vunpack.c.l.b16 %v1111
    %v1156 = vunpack.c.l.b16 %v1112
    %v1157 = vunpack.c.l.b16 %v1113
    %v1158 = vunpack.c.l.b16 %v1114
    %v1159 = vunpack.c.l.b16 %v1115
    %v1160 = vunpack.c.l.b16 %v1116
    %v1161 = vunpack.c.l.b16 %v1117
    %v1162 = vunpack.c.l.b16 %v1118
    %v1163 = vunpack.c.l.b16 %v1119
    %v1164 = vunpack.c.l.b16 %v1120
    %v1165 = vpack.c.b16 %v1150, %v1149
    %v1166 = vpack.c.b16 %v1152, %v1151
    %v1167 = vpack.c.b16 %v1154, %v1153
    %v1168 = vpack.c.b16 %v1156, %v1155
    %v1169 = vpack.c.b16 %v1158, %v1157
    %v1170 = vpack.c.b16 %v1160, %v1159
    %v1171 = vpack.c.b16 %v1162, %v1161
    %v1172 = vpack.c.b16 %v1164, %v1163
    %1181 = vmatprep.subr.bf16.mxu0 0
    %1182 = vmatpush1.bf16.msra.mxu0 %v1165
    %1183 = vmatprep.subr.bf16.mxu0 0
    %1184 = vmatpush1.bf16.msra.mxu0 %v1166
    %1185 = vmatprep.subr.bf16.mxu0 0
    %1186 = vmatpush1.bf16.msra.mxu0 %v1167
    %1187 = vmatprep.subr.bf16.mxu0 0
    %1188 = vmatpush1.bf16.msra.mxu0 %v1168
    %1189 = vmatprep.subr.bf16.mxu0 0
    %1190 = vmatpush1.bf16.msra.mxu0 %v1169
    %1191 = vmatprep.subr.bf16.mxu0 0
    %1192 = vmatpush1.bf16.msra.mxu0 %v1170
    %1193 = vmatprep.subr.bf16.mxu0 0
    %1194 = vmatpush1.bf16.msra.mxu0 %v1171
    %1195 = vmatprep.subr.bf16.mxu0 0
    %1196 = vmatpush1.bf16.msra.mxu0 %v1172
    %1197 = vmatprep.subr.bf16.mxu0 0
    %1198 = vmatpush1.bf16.msra.mxu0 0
    %1199 = vmatprep.subr.bf16.mxu0 0
    %1200 = vmatpush1.bf16.msra.mxu0 0
    %1201 = vmatprep.subr.bf16.mxu0 0
    %1202 = vmatpush1.bf16.msra.mxu0 0
    %1203 = vmatprep.subr.bf16.mxu0 0
    %1204 = vmatpush1.bf16.msra.mxu0 0
    %1205 = vmatprep.subr.bf16.mxu0 0
    %1206 = vmatpush1.bf16.msra.mxu0 0
    %1207 = vmatprep.subr.bf16.mxu0 0
    %1208 = vmatpush1.bf16.msra.mxu0 0
    %1209 = vmatprep.subr.bf16.mxu0 0
    %1210 = vmatpush1.bf16.msra.mxu0 0
    %1211 = vmatprep.subr.bf16.mxu0 0
    %1212 = vmatpush1.bf16.msra.mxu0 0
    %1213 = vmatprep.mubr.bf16.mxu0 0
    %1214 = vmatmul.mubr.bf16.gmra.mrb[0].mxu0 %v1121
    %v1215 = vpop.f32.mrb[0].mxu0
    %v1216 = vadd.f32 %v1131, %v1215
    %v1217 = vpop.f32.mrb[0].mxu0
    %v1218 = vpop.f32.mrb[0].mxu0
    %v1219 = vadd.f32 %v1131, %v1218
    %v1220 = vpop.f32.mrb[0].mxu0
    %1221 = vmatprep.mubr.bf16.mxu0 0
    %1222 = vmatmul.mubr.bf16.gmra.mrb[0].mxu0 %v1122
    %v1223 = vpop.f32.mrb[0].mxu0
    %v1224 = vadd.f32 %v1131, %v1223
    %v1225 = vpop.f32.mrb[0].mxu0
    %v1226 = vpop.f32.mrb[0].mxu0
    %v1227 = vadd.f32 %v1131, %v1226
    %v1228 = vpop.f32.mrb[0].mxu0
    %1229 = vmatprep.mubr.bf16.mxu0 0
    %1230 = vmatmul.mubr.bf16.gmra.mrb[0].mxu0 %v1123
    %v1231 = vpop.f32.mrb[0].mxu0
    %v1232 = vadd.f32 %v1131, %v1231
    %v1233 = vpop.f32.mrb[0].mxu0
    %v1234 = vpop.f32.mrb[0].mxu0
    %v1235 = vadd.f32 %v1131, %v1234
    %v1236 = vpop.f32.mrb[0].mxu0
    %1237 = vmatprep.mubr.bf16.mxu0 0
    %1238 = vmatmul.mubr.bf16.gmra.mrb[0].mxu0 %v1124
    %v1239 = vpop.f32.mrb[0].mxu0
    %v1240 = vadd.f32 %v1131, %v1239
    %v1241 = vpop.f32.mrb[0].mxu0
    %v1242 = vpop.f32.mrb[0].mxu0
    %v1243 = vadd.f32 %v1131, %v1242
    %v1244 = vpop.f32.mrb[0].mxu0
    %1245 = vdwg.mxu0
    %v1246 = vadd.f32 %v877, %v1216
    %v1247 = vadd.f32 %v878, %v1219
    %v1248 = vadd.f32 %v879, %v1224
    %v1249 = vadd.f32 %v880, %v1227
    %v1250 = vadd.f32 %v881, %v1232
    %v1251 = vadd.f32 %v882, %v1235
    %v1252 = vadd.f32 %v883, %v1240
    %v1253 = vadd.f32 %v884, %v1243
    %v1254 = vld [vmem:[%s6] sm:$0x1]
    %v1256 = vlaneseq
    %v1257 = vshrl.u32 %v1256, 7
    %v1258 = vsub.s32 0, %v1257
    %v1259 = vrot.slane %v1254, %v1258
    %v1261 = vadd.f32 %v1246, %v1259
    %v1262 = vadd.f32 %v1247, %v1259
    %v1263 = vadd.f32 %v1248, %v1259
    %v1264 = vadd.f32 %v1249, %v1259
    %v1265 = vadd.f32 %v1250, %v1259
    %v1266 = vadd.f32 %v1251, %v1259
    %v1267 = vadd.f32 %v1252, %v1259
    %v1268 = vadd.f32 %v1253, %v1259
    %vm1269 = vcmask 261120
    %1270 = vst.msk [vmem:[%s7] sm:$0xff] %vm1269, %v1261
    %1271 = vst.msk [vmem:[%s7 + $0x8] sm:$0xff] %vm1269, %v1262
    %1272 = vst.msk [vmem:[%s7 + $0x10] sm:$0xff] %vm1269, %v1263
    %1273 = vst.msk [vmem:[%s7 + $0x18] sm:$0xff] %vm1269, %v1264
    %1274 = vst.msk [vmem:[%s7 + $0x20] sm:$0xff] %vm1269, %v1265
    %1275 = vst.msk [vmem:[%s7 + $0x28] sm:$0xff] %vm1269, %v1266
    %1276 = vst.msk [vmem:[%s7 + $0x30] sm:$0xff] %vm1269, %v1267
    %1277 = vst.msk [vmem:[%s7 + $0x38] sm:$0xff] %vm1269, %v1268
    // Predicated region
    $region46: #{mixhop_forward.1} parent=1 // pred_check
      _
    $region47: #{mixhop_forward.1} parent=1 // pred_check_branch
      %1279 = sbr.rel (0) target = $region49
    $region48: #{mixhop_forward.1} parent=1 // pred_region
      _
    $region49: #{mixhop_forward.1} parent=1 // pred_fallthru
      _
    // Predicated region
    $region50: #{mixhop_forward.1} parent=1 // pred_check
      _
    $region51: #{mixhop_forward.1} parent=1 // pred_check_branch
      %1281 = sbr.rel (0) target = $region53
    $region52: #{mixhop_forward.1} parent=1 // pred_region
      _
    $region53: #{mixhop_forward.1} parent=1 // pred_fallthru
      _
    %1282 = vsyncpa [#allocation3], 1
    %1283 = vsyncpa [#allocation5], 1
    %1284 = vsyncpa [#allocation8], 1

</llo_original>
